<compile_context>
chip_gen: v5e
topology: v5e:2x2
jax: 0.10.0
libtpu: 0.0.40
codegen_flags: <defaults>
</compile_context>

<pallas_src>
import numpy as np
import jax
import jax.numpy as jnp
from jax import lax
from jax.experimental import pallas as pl
from jax.experimental.pallas import tpu as pltpu


# ----------------------------- Pallas kernel ------------------------------ #
def make_decoder_lstm_kernel(num_layers, hidden_size, seq_len):
    H = hidden_size
    T = seq_len
    L = num_layers

    def kernel(x_ref, h0_ref, c0_ref, *rest):
        """Fused multi-layer LSTM over the whole sequence.

        x_ref   : (B, T, I)      batch_first input
        h0_ref  : (L, B, H)      initial hidden states
        c0_ref  : (L, B, H)      initial cell states
        rest    : (wih_0, whh_0, b_0, ..., wih_{L-1}, whh_{L-1}, b_{L-1}, out_ref)
                  wih_l : (I_l, 4H)  = W_ih^T ;  whh_l : (H, 4H) = W_hh^T ;  b_l : (1, 4H) = b_ih+b_hh
        out_ref : (B, T, H)      top-layer hidden states
        """
        out_ref = rest[-1]
        wrefs = rest[:-1]
        B = x_ref.shape[0]

        seq = x_ref[...].astype(jnp.float32)  # (B, T, I) -- layer input, lives in VMEM/vregs

        for l in range(L):
            wih = wrefs[3 * l][...]       # (I_l, 4H)
            whh = wrefs[3 * l + 1][...]   # (H, 4H)
            b = wrefs[3 * l + 2][...]     # (1, 4H)
            in_l = seq.shape[-1]

            # --- Hoisted input projection: one big MXU matmul for the whole sequence ---
            gx = jnp.dot(seq.reshape(B * T, in_l), wih,
                         preferred_element_type=jnp.float32) + b       # (B*T, 4H)
            gx = gx.reshape(B, T, 4 * H)                                # (B, T, 4H)

            h = h0_ref[l].astype(jnp.float32)  # (B, H)
            c = c0_ref[l].astype(jnp.float32)  # (B, H)

            hs = []
            # T is static -> fully unrolled recurrence (only h @ W_hh + gate math per step).
            for t in range(T):
                gates = gx[:, t, :] + jnp.dot(h, whh,
                                              preferred_element_type=jnp.float32)  # (B, 4H)
                # Transcendentals on the full (B, 4H) vreg, then lane-slice per gate.
                sig = jax.nn.sigmoid(gates)
                tnh = jnp.tanh(gates)
                i_g = sig[:, 0 * H:1 * H]
                f_g = sig[:, 1 * H:2 * H]
                g_g = tnh[:, 2 * H:3 * H]
                o_g = sig[:, 3 * H:4 * H]
                c = f_g * c + i_g * g_g
                h = o_g * jnp.tanh(c)
                hs.append(h)

            # Inter-layer activation stays on-chip; becomes next layer's input.
            seq = jnp.stack(hs, axis=1)  # (B, T, H)

        # Single full-block store of the top-layer output.
        out_ref[...] = seq.astype(out_ref.dtype)

    return kernel


# ----------------------------- Module wrapper ------------------------------ #
def decoder_lstm_forward(x, hidden, params):
    """Equivalent of decoderLSTM.forward.

    x      : (B, T, input_size)          batch_first, like PyTorch
    hidden : (h0, c0) each (num_layers, B, H)
    params : list of per-layer dicts {wih_t, whh_t, b}
    Returns (output (B, T, H), hidden)   -- the ORIGINAL hidden, matching the PyTorch module.
    """
    h0, c0 = hidden
    B, T, _ = x.shape
    L, _, H = h0.shape

    kernel = make_decoder_lstm_kernel(L, H, T)

    weight_args = []
    for p in params:
        weight_args += [p["wih_t"], p["whh_t"], p["b"]]

    vmem = pl.BlockSpec(memory_space=pltpu.MemorySpace.VMEM)
    n_in = 3 + 3 * L

    # Size scoped VMEM to the real footprint (with headroom); keep below v7x's 64 MiB per-TC VMEM.
    tensor_bytes = sum(int(np.prod(a.shape)) * a.dtype.itemsize
                       for a in [x, h0, c0] + weight_args)
    tensor_bytes += B * T * H * 4  # output
    vmem_limit = int(min(max(4 * tensor_bytes + (4 << 20), 16 << 20), 60 << 20))

    out = pl.pallas_call(
        kernel,
        out_shape=jax.ShapeDtypeStruct((B, T, H), jnp.float32),
        in_specs=[vmem] * n_in,
        out_specs=vmem,
        compiler_params=pltpu.CompilerParams(vmem_limit_bytes=vmem_limit),
    )(x, h0, c0, *weight_args)

    return out, hidden


# ----------------------------- Pure-JAX reference -------------------------- #
def decoder_lstm_reference(x, hidden, params, H):
    h0, c0 = hidden
    seq = x  # (B, T, I)
    for l, p in enumerate(params):
        wih_t, whh_t, b = p["wih_t"], p["whh_t"], p["b"][0]

        def step(carry, x_t):
            h, c = carry
            gates = x_t @ wih_t + h @ whh_t + b
            i_g = jax.nn.sigmoid(gates[:, 0 * H:1 * H])
            f_g = jax.nn.sigmoid(gates[:, 1 * H:2 * H])
            g_g = jnp.tanh(gates[:, 2 * H:3 * H])
            o_g = jax.nn.sigmoid(gates[:, 3 * H:4 * H])
            c_new = f_g * c + i_g * g_g
            h_new = o_g * jnp.tanh(c_new)
            return (h_new, c_new), h_new

        (_, _), ys = lax.scan(step, (h0[l], c0[l]), jnp.transpose(seq, (1, 0, 2)))
        seq = jnp.transpose(ys, (1, 0, 2))
    return seq, hidden


# ----------------------------- Parameter init ------------------------------ #
def init_params(key, input_size, hidden_size, num_layers):
    """Synthetic init mirroring nn.LSTM parameter shapes (gate order [i, f, g, o]).

    PyTorch per layer l: weight_ih_l{k} (4H, I_l), weight_hh_l{k} (4H, H),
                         bias_ih_l{k} (4H,), bias_hh_l{k} (4H,).
    Stored pre-transposed to (in_features, 4H); biases summed.
    """
    params = []
    bound = 1.0 / np.sqrt(hidden_size)
    for l in range(num_layers):
        in_l = input_size if l == 0 else hidden_size
        key, k1, k2, k3, k4 = jax.random.split(key, 5)
        w_ih = jax.random.uniform(k1, (4 * hidden_size, in_l), jnp.float32, -bound, bound)
        w_hh = jax.random.uniform(k2, (4 * hidden_size, hidden_size), jnp.float32, -bound, bound)
        b_ih = jax.random.uniform(k3, (4 * hidden_size,), jnp.float32, -bound, bound)
        b_hh = jax.random.uniform(k4, (4 * hidden_size,), jnp.float32, -bound, bound)
        params.append(
            {
                "wih_t": jnp.transpose(w_ih),      # (I_l, 4H)
                "whh_t": jnp.transpose(w_hh),      # (H, 4H)
                "b": (b_ih + b_hh)[None, :],       # (1, 4H)
            }
        )
    return params


# ----------------------------------- Main ----------------------------------- #
if __name__ == "__main__":
    B, T = 2, 8
    INPUT_SIZE = 16
    HIDDEN = 32
    NUM_LAYERS = 2

    key = jax.random.PRNGKey(0)
    k_x, k_h, k_c, k_p = jax.random.split(key, 4)

    x = jax.random.normal(k_x, (B, T, INPUT_SIZE), jnp.float32)          # batch_first input
    h0 = jax.random.normal(k_h, (NUM_LAYERS, B, HIDDEN), jnp.float32)
    c0 = jax.random.normal(k_c, (NUM_LAYERS, B, HIDDEN), jnp.float32)
    hidden = (h0, c0)

    params = init_params(k_p, INPUT_SIZE, HIDDEN, NUM_LAYERS)

    output, hidden_out = decoder_lstm_forward(x, hidden, params)
    output = jax.block_until_ready(output)

    # Correctness check against pure-JAX reference
    ref_out, ref_hidden = decoder_lstm_reference(x, hidden, params, HIDDEN)
    np.testing.assert_allclose(np.asarray(output), np.asarray(ref_out), rtol=1e-5, atol=1e-5)
    # forward returns the ORIGINAL hidden, unchanged
    np.testing.assert_allclose(np.asarray(hidden_out[0]), np.asarray(h0))
    np.testing.assert_allclose(np.asarray(hidden_out[1]), np.asarray(c0))

    assert output.shape == (B, T, HIDDEN)
    print("KERNEL_OK")
</pallas_src>

<mosaic_0001>
module attributes {stable_mosaic.version = 11 : i64} {
  func.func @kernel(%arg0: memref<2x8x16xf32, #tpu.memory_space<vmem>>, %arg1: memref<2x2x32xf32, #tpu.memory_space<vmem>>, %arg2: memref<2x2x32xf32, #tpu.memory_space<vmem>>, %arg3: memref<16x128xf32, #tpu.memory_space<vmem>>, %arg4: memref<32x128xf32, #tpu.memory_space<vmem>>, %arg5: memref<1x128xf32, #tpu.memory_space<vmem>>, %arg6: memref<32x128xf32, #tpu.memory_space<vmem>>, %arg7: memref<32x128xf32, #tpu.memory_space<vmem>>, %arg8: memref<1x128xf32, #tpu.memory_space<vmem>>, %arg9: memref<2x8x32xf32, #tpu.memory_space<vmem>>) attributes {dimension_semantics = [], scalar_prefetch = 0 : i64, scratch_operands = 0 : i64, tpu.core_type = #tpu.core_type<tc>} {
    %c0 = arith.constant 0 : index
    %c0_0 = arith.constant 0 : index
    %c0_1 = arith.constant 0 : index
    %0 = vector.load %arg0[%c0, %c0_0, %c0_1] : memref<2x8x16xf32, #tpu.memory_space<vmem>>, vector<2x8x16xf32>
    %c0_2 = arith.constant 0 : index
    %c0_3 = arith.constant 0 : index
    %1 = vector.load %arg3[%c0_2, %c0_3] : memref<16x128xf32, #tpu.memory_space<vmem>>, vector<16x128xf32>
    %c0_4 = arith.constant 0 : index
    %c0_5 = arith.constant 0 : index
    %2 = vector.load %arg4[%c0_4, %c0_5] : memref<32x128xf32, #tpu.memory_space<vmem>>, vector<32x128xf32>
    %c0_6 = arith.constant 0 : index
    %c0_7 = arith.constant 0 : index
    %3 = vector.load %arg5[%c0_6, %c0_7] : memref<1x128xf32, #tpu.memory_space<vmem>>, vector<1x128xf32>
    %4 = vector.shape_cast %0 : vector<2x8x16xf32> to vector<16x16xf32>
    %cst = arith.constant dense<0.000000e+00> : vector<16x128xf32>
    %5 = tpu.matmul %4, %1, %cst {dimension_numbers = #tpu.dot_dimension_numbers<[1], [0], [0], [1], [0, 0, 1, 1], [], []>} : vector<16x16xf32>, vector<16x128xf32>, vector<16x128xf32> -> vector<16x128xf32>
    %6 = vector.broadcast %3 : vector<1x128xf32> to vector<16x128xf32>
    %7 = arith.addf %5, %6 : vector<16x128xf32>
    %8 = vector.shape_cast %7 : vector<16x128xf32> to vector<2x8x128xf32>
    %c0_8 = arith.constant 0 : index
    %c0_9 = arith.constant 0 : index
    %c0_10 = arith.constant 0 : index
    %9 = vector.load %arg1[%c0_8, %c0_9, %c0_10] : memref<2x2x32xf32, #tpu.memory_space<vmem>>, vector<1x2x32xf32>
    %10 = vector.shape_cast %9 : vector<1x2x32xf32> to vector<2x32xf32>
    %c0_11 = arith.constant 0 : index
    %c0_12 = arith.constant 0 : index
    %c0_13 = arith.constant 0 : index
    %11 = vector.load %arg2[%c0_11, %c0_12, %c0_13] : memref<2x2x32xf32, #tpu.memory_space<vmem>>, vector<1x2x32xf32>
    %12 = vector.shape_cast %11 : vector<1x2x32xf32> to vector<2x32xf32>
    %13 = vector.extract_strided_slice %8 {offsets = [0, 0, 0], sizes = [2, 1, 128], strides = [1, 1, 1]} : vector<2x8x128xf32> to vector<2x1x128xf32>
    %14 = vector.shape_cast %13 : vector<2x1x128xf32> to vector<2x128xf32>
    %cst_14 = arith.constant dense<0.000000e+00> : vector<2x128xf32>
    %15 = tpu.matmul %10, %2, %cst_14 {dimension_numbers = #tpu.dot_dimension_numbers<[1], [0], [0], [1], [0, 0, 1, 1], [], []>} : vector<2x32xf32>, vector<32x128xf32>, vector<2x128xf32> -> vector<2x128xf32>
    %16 = arith.addf %14, %15 : vector<2x128xf32>
    %17 = arith.negf %16 : vector<2x128xf32>
    %18 = math.exp %17 : vector<2x128xf32>
    %cst_15 = arith.constant 1.000000e+00 : f32
    %19 = vector.broadcast %cst_15 : f32 to vector<2x128xf32>
    %20 = arith.addf %19, %18 : vector<2x128xf32>
    %21 = arith.divf %19, %20 : vector<2x128xf32>
    %22 = math.tanh %16 : vector<2x128xf32>
    %23 = vector.extract_strided_slice %21 {offsets = [0, 0], sizes = [2, 32], strides = [1, 1]} : vector<2x128xf32> to vector<2x32xf32>
    %24 = vector.extract_strided_slice %21 {offsets = [0, 32], sizes = [2, 32], strides = [1, 1]} : vector<2x128xf32> to vector<2x32xf32>
    %25 = vector.extract_strided_slice %22 {offsets = [0, 64], sizes = [2, 32], strides = [1, 1]} : vector<2x128xf32> to vector<2x32xf32>
    %26 = vector.extract_strided_slice %21 {offsets = [0, 96], sizes = [2, 32], strides = [1, 1]} : vector<2x128xf32> to vector<2x32xf32>
    %27 = arith.mulf %24, %12 : vector<2x32xf32>
    %28 = arith.mulf %23, %25 : vector<2x32xf32>
    %29 = arith.addf %27, %28 : vector<2x32xf32>
    %30 = math.tanh %29 : vector<2x32xf32>
    %31 = arith.mulf %26, %30 : vector<2x32xf32>
    %32 = vector.extract_strided_slice %8 {offsets = [0, 1, 0], sizes = [2, 1, 128], strides = [1, 1, 1]} : vector<2x8x128xf32> to vector<2x1x128xf32>
    %33 = vector.shape_cast %32 : vector<2x1x128xf32> to vector<2x128xf32>
    %cst_16 = arith.constant dense<0.000000e+00> : vector<2x128xf32>
    %34 = tpu.matmul %31, %2, %cst_16 {dimension_numbers = #tpu.dot_dimension_numbers<[1], [0], [0], [1], [0, 0, 1, 1], [], []>} : vector<2x32xf32>, vector<32x128xf32>, vector<2x128xf32> -> vector<2x128xf32>
    %35 = arith.addf %33, %34 : vector<2x128xf32>
    %36 = arith.negf %35 : vector<2x128xf32>
    %37 = math.exp %36 : vector<2x128xf32>
    %cst_17 = arith.constant 1.000000e+00 : f32
    %38 = vector.broadcast %cst_17 : f32 to vector<2x128xf32>
    %39 = arith.addf %38, %37 : vector<2x128xf32>
    %40 = arith.divf %38, %39 : vector<2x128xf32>
    %41 = math.tanh %35 : vector<2x128xf32>
    %42 = vector.extract_strided_slice %40 {offsets = [0, 0], sizes = [2, 32], strides = [1, 1]} : vector<2x128xf32> to vector<2x32xf32>
    %43 = vector.extract_strided_slice %40 {offsets = [0, 32], sizes = [2, 32], strides = [1, 1]} : vector<2x128xf32> to vector<2x32xf32>
    %44 = vector.extract_strided_slice %41 {offsets = [0, 64], sizes = [2, 32], strides = [1, 1]} : vector<2x128xf32> to vector<2x32xf32>
    %45 = vector.extract_strided_slice %40 {offsets = [0, 96], sizes = [2, 32], strides = [1, 1]} : vector<2x128xf32> to vector<2x32xf32>
    %46 = arith.mulf %43, %29 : vector<2x32xf32>
    %47 = arith.mulf %42, %44 : vector<2x32xf32>
    %48 = arith.addf %46, %47 : vector<2x32xf32>
    %49 = math.tanh %48 : vector<2x32xf32>
    %50 = arith.mulf %45, %49 : vector<2x32xf32>
    %51 = vector.extract_strided_slice %8 {offsets = [0, 2, 0], sizes = [2, 1, 128], strides = [1, 1, 1]} : vector<2x8x128xf32> to vector<2x1x128xf32>
    %52 = vector.shape_cast %51 : vector<2x1x128xf32> to vector<2x128xf32>
    %cst_18 = arith.constant dense<0.000000e+00> : vector<2x128xf32>
    %53 = tpu.matmul %50, %2, %cst_18 {dimension_numbers = #tpu.dot_dimension_numbers<[1], [0], [0], [1], [0, 0, 1, 1], [], []>} : vector<2x32xf32>, vector<32x128xf32>, vector<2x128xf32> -> vector<2x128xf32>
    %54 = arith.addf %52, %53 : vector<2x128xf32>
    %55 = arith.negf %54 : vector<2x128xf32>
    %56 = math.exp %55 : vector<2x128xf32>
    %cst_19 = arith.constant 1.000000e+00 : f32
    %57 = vector.broadcast %cst_19 : f32 to vector<2x128xf32>
    %58 = arith.addf %57, %56 : vector<2x128xf32>
    %59 = arith.divf %57, %58 : vector<2x128xf32>
    %60 = math.tanh %54 : vector<2x128xf32>
    %61 = vector.extract_strided_slice %59 {offsets = [0, 0], sizes = [2, 32], strides = [1, 1]} : vector<2x128xf32> to vector<2x32xf32>
    %62 = vector.extract_strided_slice %59 {offsets = [0, 32], sizes = [2, 32], strides = [1, 1]} : vector<2x128xf32> to vector<2x32xf32>
    %63 = vector.extract_strided_slice %60 {offsets = [0, 64], sizes = [2, 32], strides = [1, 1]} : vector<2x128xf32> to vector<2x32xf32>
    %64 = vector.extract_strided_slice %59 {offsets = [0, 96], sizes = [2, 32], strides = [1, 1]} : vector<2x128xf32> to vector<2x32xf32>
    %65 = arith.mulf %62, %48 : vector<2x32xf32>
    %66 = arith.mulf %61, %63 : vector<2x32xf32>
    %67 = arith.addf %65, %66 : vector<2x32xf32>
    %68 = math.tanh %67 : vector<2x32xf32>
    %69 = arith.mulf %64, %68 : vector<2x32xf32>
    %70 = vector.extract_strided_slice %8 {offsets = [0, 3, 0], sizes = [2, 1, 128], strides = [1, 1, 1]} : vector<2x8x128xf32> to vector<2x1x128xf32>
    %71 = vector.shape_cast %70 : vector<2x1x128xf32> to vector<2x128xf32>
    %cst_20 = arith.constant dense<0.000000e+00> : vector<2x128xf32>
    %72 = tpu.matmul %69, %2, %cst_20 {dimension_numbers = #tpu.dot_dimension_numbers<[1], [0], [0], [1], [0, 0, 1, 1], [], []>} : vector<2x32xf32>, vector<32x128xf32>, vector<2x128xf32> -> vector<2x128xf32>
    %73 = arith.addf %71, %72 : vector<2x128xf32>
    %74 = arith.negf %73 : vector<2x128xf32>
    %75 = math.exp %74 : vector<2x128xf32>
    %cst_21 = arith.constant 1.000000e+00 : f32
    %76 = vector.broadcast %cst_21 : f32 to vector<2x128xf32>
    %77 = arith.addf %76, %75 : vector<2x128xf32>
    %78 = arith.divf %76, %77 : vector<2x128xf32>
    %79 = math.tanh %73 : vector<2x128xf32>
    %80 = vector.extract_strided_slice %78 {offsets = [0, 0], sizes = [2, 32], strides = [1, 1]} : vector<2x128xf32> to vector<2x32xf32>
    %81 = vector.extract_strided_slice %78 {offsets = [0, 32], sizes = [2, 32], strides = [1, 1]} : vector<2x128xf32> to vector<2x32xf32>
    %82 = vector.extract_strided_slice %79 {offsets = [0, 64], sizes = [2, 32], strides = [1, 1]} : vector<2x128xf32> to vector<2x32xf32>
    %83 = vector.extract_strided_slice %78 {offsets = [0, 96], sizes = [2, 32], strides = [1, 1]} : vector<2x128xf32> to vector<2x32xf32>
    %84 = arith.mulf %81, %67 : vector<2x32xf32>
    %85 = arith.mulf %80, %82 : vector<2x32xf32>
    %86 = arith.addf %84, %85 : vector<2x32xf32>
    %87 = math.tanh %86 : vector<2x32xf32>
    %88 = arith.mulf %83, %87 : vector<2x32xf32>
    %89 = vector.extract_strided_slice %8 {offsets = [0, 4, 0], sizes = [2, 1, 128], strides = [1, 1, 1]} : vector<2x8x128xf32> to vector<2x1x128xf32>
    %90 = vector.shape_cast %89 : vector<2x1x128xf32> to vector<2x128xf32>
    %cst_22 = arith.constant dense<0.000000e+00> : vector<2x128xf32>
    %91 = tpu.matmul %88, %2, %cst_22 {dimension_numbers = #tpu.dot_dimension_numbers<[1], [0], [0], [1], [0, 0, 1, 1], [], []>} : vector<2x32xf32>, vector<32x128xf32>, vector<2x128xf32> -> vector<2x128xf32>
    %92 = arith.addf %90, %91 : vector<2x128xf32>
    %93 = arith.negf %92 : vector<2x128xf32>
    %94 = math.exp %93 : vector<2x128xf32>
    %cst_23 = arith.constant 1.000000e+00 : f32
    %95 = vector.broadcast %cst_23 : f32 to vector<2x128xf32>
    %96 = arith.addf %95, %94 : vector<2x128xf32>
    %97 = arith.divf %95, %96 : vector<2x128xf32>
    %98 = math.tanh %92 : vector<2x128xf32>
    %99 = vector.extract_strided_slice %97 {offsets = [0, 0], sizes = [2, 32], strides = [1, 1]} : vector<2x128xf32> to vector<2x32xf32>
    %100 = vector.extract_strided_slice %97 {offsets = [0, 32], sizes = [2, 32], strides = [1, 1]} : vector<2x128xf32> to vector<2x32xf32>
    %101 = vector.extract_strided_slice %98 {offsets = [0, 64], sizes = [2, 32], strides = [1, 1]} : vector<2x128xf32> to vector<2x32xf32>
    %102 = vector.extract_strided_slice %97 {offsets = [0, 96], sizes = [2, 32], strides = [1, 1]} : vector<2x128xf32> to vector<2x32xf32>
    %103 = arith.mulf %100, %86 : vector<2x32xf32>
    %104 = arith.mulf %99, %101 : vector<2x32xf32>
    %105 = arith.addf %103, %104 : vector<2x32xf32>
    %106 = math.tanh %105 : vector<2x32xf32>
    %107 = arith.mulf %102, %106 : vector<2x32xf32>
    %108 = vector.extract_strided_slice %8 {offsets = [0, 5, 0], sizes = [2, 1, 128], strides = [1, 1, 1]} : vector<2x8x128xf32> to vector<2x1x128xf32>
    %109 = vector.shape_cast %108 : vector<2x1x128xf32> to vector<2x128xf32>
    %cst_24 = arith.constant dense<0.000000e+00> : vector<2x128xf32>
    %110 = tpu.matmul %107, %2, %cst_24 {dimension_numbers = #tpu.dot_dimension_numbers<[1], [0], [0], [1], [0, 0, 1, 1], [], []>} : vector<2x32xf32>, vector<32x128xf32>, vector<2x128xf32> -> vector<2x128xf32>
    %111 = arith.addf %109, %110 : vector<2x128xf32>
    %112 = arith.negf %111 : vector<2x128xf32>
    %113 = math.exp %112 : vector<2x128xf32>
    %cst_25 = arith.constant 1.000000e+00 : f32
    %114 = vector.broadcast %cst_25 : f32 to vector<2x128xf32>
    %115 = arith.addf %114, %113 : vector<2x128xf32>
    %116 = arith.divf %114, %115 : vector<2x128xf32>
    %117 = math.tanh %111 : vector<2x128xf32>
    %118 = vector.extract_strided_slice %116 {offsets = [0, 0], sizes = [2, 32], strides = [1, 1]} : vector<2x128xf32> to vector<2x32xf32>
    %119 = vector.extract_strided_slice %116 {offsets = [0, 32], sizes = [2, 32], strides = [1, 1]} : vector<2x128xf32> to vector<2x32xf32>
    %120 = vector.extract_strided_slice %117 {offsets = [0, 64], sizes = [2, 32], strides = [1, 1]} : vector<2x128xf32> to vector<2x32xf32>
    %121 = vector.extract_strided_slice %116 {offsets = [0, 96], sizes = [2, 32], strides = [1, 1]} : vector<2x128xf32> to vector<2x32xf32>
    %122 = arith.mulf %119, %105 : vector<2x32xf32>
    %123 = arith.mulf %118, %120 : vector<2x32xf32>
    %124 = arith.addf %122, %123 : vector<2x32xf32>
    %125 = math.tanh %124 : vector<2x32xf32>
    %126 = arith.mulf %121, %125 : vector<2x32xf32>
    %127 = vector.extract_strided_slice %8 {offsets = [0, 6, 0], sizes = [2, 1, 128], strides = [1, 1, 1]} : vector<2x8x128xf32> to vector<2x1x128xf32>
    %128 = vector.shape_cast %127 : vector<2x1x128xf32> to vector<2x128xf32>
    %cst_26 = arith.constant dense<0.000000e+00> : vector<2x128xf32>
    %129 = tpu.matmul %126, %2, %cst_26 {dimension_numbers = #tpu.dot_dimension_numbers<[1], [0], [0], [1], [0, 0, 1, 1], [], []>} : vector<2x32xf32>, vector<32x128xf32>, vector<2x128xf32> -> vector<2x128xf32>
    %130 = arith.addf %128, %129 : vector<2x128xf32>
    %131 = arith.negf %130 : vector<2x128xf32>
    %132 = math.exp %131 : vector<2x128xf32>
    %cst_27 = arith.constant 1.000000e+00 : f32
    %133 = vector.broadcast %cst_27 : f32 to vector<2x128xf32>
    %134 = arith.addf %133, %132 : vector<2x128xf32>
    %135 = arith.divf %133, %134 : vector<2x128xf32>
    %136 = math.tanh %130 : vector<2x128xf32>
    %137 = vector.extract_strided_slice %135 {offsets = [0, 0], sizes = [2, 32], strides = [1, 1]} : vector<2x128xf32> to vector<2x32xf32>
    %138 = vector.extract_strided_slice %135 {offsets = [0, 32], sizes = [2, 32], strides = [1, 1]} : vector<2x128xf32> to vector<2x32xf32>
    %139 = vector.extract_strided_slice %136 {offsets = [0, 64], sizes = [2, 32], strides = [1, 1]} : vector<2x128xf32> to vector<2x32xf32>
    %140 = vector.extract_strided_slice %135 {offsets = [0, 96], sizes = [2, 32], strides = [1, 1]} : vector<2x128xf32> to vector<2x32xf32>
    %141 = arith.mulf %138, %124 : vector<2x32xf32>
    %142 = arith.mulf %137, %139 : vector<2x32xf32>
    %143 = arith.addf %141, %142 : vector<2x32xf32>
    %144 = math.tanh %143 : vector<2x32xf32>
    %145 = arith.mulf %140, %144 : vector<2x32xf32>
    %146 = vector.extract_strided_slice %8 {offsets = [0, 7, 0], sizes = [2, 1, 128], strides = [1, 1, 1]} : vector<2x8x128xf32> to vector<2x1x128xf32>
    %147 = vector.shape_cast %146 : vector<2x1x128xf32> to vector<2x128xf32>
    %cst_28 = arith.constant dense<0.000000e+00> : vector<2x128xf32>
    %148 = tpu.matmul %145, %2, %cst_28 {dimension_numbers = #tpu.dot_dimension_numbers<[1], [0], [0], [1], [0, 0, 1, 1], [], []>} : vector<2x32xf32>, vector<32x128xf32>, vector<2x128xf32> -> vector<2x128xf32>
    %149 = arith.addf %147, %148 : vector<2x128xf32>
    %150 = arith.negf %149 : vector<2x128xf32>
    %151 = math.exp %150 : vector<2x128xf32>
    %cst_29 = arith.constant 1.000000e+00 : f32
    %152 = vector.broadcast %cst_29 : f32 to vector<2x128xf32>
    %153 = arith.addf %152, %151 : vector<2x128xf32>
    %154 = arith.divf %152, %153 : vector<2x128xf32>
    %155 = math.tanh %149 : vector<2x128xf32>
    %156 = vector.extract_strided_slice %154 {offsets = [0, 0], sizes = [2, 32], strides = [1, 1]} : vector<2x128xf32> to vector<2x32xf32>
    %157 = vector.extract_strided_slice %154 {offsets = [0, 32], sizes = [2, 32], strides = [1, 1]} : vector<2x128xf32> to vector<2x32xf32>
    %158 = vector.extract_strided_slice %155 {offsets = [0, 64], sizes = [2, 32], strides = [1, 1]} : vector<2x128xf32> to vector<2x32xf32>
    %159 = vector.extract_strided_slice %154 {offsets = [0, 96], sizes = [2, 32], strides = [1, 1]} : vector<2x128xf32> to vector<2x32xf32>
    %160 = arith.mulf %157, %143 : vector<2x32xf32>
    %161 = arith.mulf %156, %158 : vector<2x32xf32>
    %162 = arith.addf %160, %161 : vector<2x32xf32>
    %163 = math.tanh %162 : vector<2x32xf32>
    %164 = arith.mulf %159, %163 : vector<2x32xf32>
    %165 = vector.shape_cast %31 : vector<2x32xf32> to vector<2x1x32xf32>
    %166 = vector.shape_cast %50 : vector<2x32xf32> to vector<2x1x32xf32>
    %167 = vector.shape_cast %69 : vector<2x32xf32> to vector<2x1x32xf32>
    %168 = vector.shape_cast %88 : vector<2x32xf32> to vector<2x1x32xf32>
    %169 = vector.shape_cast %107 : vector<2x32xf32> to vector<2x1x32xf32>
    %170 = vector.shape_cast %126 : vector<2x32xf32> to vector<2x1x32xf32>
    %171 = vector.shape_cast %145 : vector<2x32xf32> to vector<2x1x32xf32>
    %172 = vector.shape_cast %164 : vector<2x32xf32> to vector<2x1x32xf32>
    %173 = tpu.concatenate %165, %166, %167, %168, %169, %170, %171, %172 in 1 : vector<2x1x32xf32>, vector<2x1x32xf32>, vector<2x1x32xf32>, vector<2x1x32xf32>, vector<2x1x32xf32>, vector<2x1x32xf32>, vector<2x1x32xf32>, vector<2x1x32xf32> -> vector<2x8x32xf32>
    %c0_30 = arith.constant 0 : index
    %c0_31 = arith.constant 0 : index
    %174 = vector.load %arg6[%c0_30, %c0_31] : memref<32x128xf32, #tpu.memory_space<vmem>>, vector<32x128xf32>
    %c0_32 = arith.constant 0 : index
    %c0_33 = arith.constant 0 : index
    %175 = vector.load %arg7[%c0_32, %c0_33] : memref<32x128xf32, #tpu.memory_space<vmem>>, vector<32x128xf32>
    %c0_34 = arith.constant 0 : index
    %c0_35 = arith.constant 0 : index
    %176 = vector.load %arg8[%c0_34, %c0_35] : memref<1x128xf32, #tpu.memory_space<vmem>>, vector<1x128xf32>
    %177 = vector.shape_cast %173 : vector<2x8x32xf32> to vector<16x32xf32>
    %cst_36 = arith.constant dense<0.000000e+00> : vector<16x128xf32>
    %178 = tpu.matmul %177, %174, %cst_36 {dimension_numbers = #tpu.dot_dimension_numbers<[1], [0], [0], [1], [0, 0, 1, 1], [], []>} : vector<16x32xf32>, vector<32x128xf32>, vector<16x128xf32> -> vector<16x128xf32>
    %179 = vector.broadcast %176 : vector<1x128xf32> to vector<16x128xf32>
    %180 = arith.addf %178, %179 : vector<16x128xf32>
    %181 = vector.shape_cast %180 : vector<16x128xf32> to vector<2x8x128xf32>
    %c1 = arith.constant 1 : index
    %c0_37 = arith.constant 0 : index
    %c0_38 = arith.constant 0 : index
    %182 = vector.load %arg1[%c1, %c0_37, %c0_38] : memref<2x2x32xf32, #tpu.memory_space<vmem>>, vector<1x2x32xf32>
    %183 = vector.shape_cast %182 : vector<1x2x32xf32> to vector<2x32xf32>
    %c1_39 = arith.constant 1 : index
    %c0_40 = arith.constant 0 : index
    %c0_41 = arith.constant 0 : index
    %184 = vector.load %arg2[%c1_39, %c0_40, %c0_41] : memref<2x2x32xf32, #tpu.memory_space<vmem>>, vector<1x2x32xf32>
    %185 = vector.shape_cast %184 : vector<1x2x32xf32> to vector<2x32xf32>
    %186 = vector.extract_strided_slice %181 {offsets = [0, 0, 0], sizes = [2, 1, 128], strides = [1, 1, 1]} : vector<2x8x128xf32> to vector<2x1x128xf32>
    %187 = vector.shape_cast %186 : vector<2x1x128xf32> to vector<2x128xf32>
    %cst_42 = arith.constant dense<0.000000e+00> : vector<2x128xf32>
    %188 = tpu.matmul %183, %175, %cst_42 {dimension_numbers = #tpu.dot_dimension_numbers<[1], [0], [0], [1], [0, 0, 1, 1], [], []>} : vector<2x32xf32>, vector<32x128xf32>, vector<2x128xf32> -> vector<2x128xf32>
    %189 = arith.addf %187, %188 : vector<2x128xf32>
    %190 = arith.negf %189 : vector<2x128xf32>
    %191 = math.exp %190 : vector<2x128xf32>
    %cst_43 = arith.constant 1.000000e+00 : f32
    %192 = vector.broadcast %cst_43 : f32 to vector<2x128xf32>
    %193 = arith.addf %192, %191 : vector<2x128xf32>
    %194 = arith.divf %192, %193 : vector<2x128xf32>
    %195 = math.tanh %189 : vector<2x128xf32>
    %196 = vector.extract_strided_slice %194 {offsets = [0, 0], sizes = [2, 32], strides = [1, 1]} : vector<2x128xf32> to vector<2x32xf32>
    %197 = vector.extract_strided_slice %194 {offsets = [0, 32], sizes = [2, 32], strides = [1, 1]} : vector<2x128xf32> to vector<2x32xf32>
    %198 = vector.extract_strided_slice %195 {offsets = [0, 64], sizes = [2, 32], strides = [1, 1]} : vector<2x128xf32> to vector<2x32xf32>
    %199 = vector.extract_strided_slice %194 {offsets = [0, 96], sizes = [2, 32], strides = [1, 1]} : vector<2x128xf32> to vector<2x32xf32>
    %200 = arith.mulf %197, %185 : vector<2x32xf32>
    %201 = arith.mulf %196, %198 : vector<2x32xf32>
    %202 = arith.addf %200, %201 : vector<2x32xf32>
    %203 = math.tanh %202 : vector<2x32xf32>
    %204 = arith.mulf %199, %203 : vector<2x32xf32>
    %205 = vector.extract_strided_slice %181 {offsets = [0, 1, 0], sizes = [2, 1, 128], strides = [1, 1, 1]} : vector<2x8x128xf32> to vector<2x1x128xf32>
    %206 = vector.shape_cast %205 : vector<2x1x128xf32> to vector<2x128xf32>
    %cst_44 = arith.constant dense<0.000000e+00> : vector<2x128xf32>
    %207 = tpu.matmul %204, %175, %cst_44 {dimension_numbers = #tpu.dot_dimension_numbers<[1], [0], [0], [1], [0, 0, 1, 1], [], []>} : vector<2x32xf32>, vector<32x128xf32>, vector<2x128xf32> -> vector<2x128xf32>
    %208 = arith.addf %206, %207 : vector<2x128xf32>
    %209 = arith.negf %208 : vector<2x128xf32>
    %210 = math.exp %209 : vector<2x128xf32>
    %cst_45 = arith.constant 1.000000e+00 : f32
    %211 = vector.broadcast %cst_45 : f32 to vector<2x128xf32>
    %212 = arith.addf %211, %210 : vector<2x128xf32>
    %213 = arith.divf %211, %212 : vector<2x128xf32>
    %214 = math.tanh %208 : vector<2x128xf32>
    %215 = vector.extract_strided_slice %213 {offsets = [0, 0], sizes = [2, 32], strides = [1, 1]} : vector<2x128xf32> to vector<2x32xf32>
    %216 = vector.extract_strided_slice %213 {offsets = [0, 32], sizes = [2, 32], strides = [1, 1]} : vector<2x128xf32> to vector<2x32xf32>
    %217 = vector.extract_strided_slice %214 {offsets = [0, 64], sizes = [2, 32], strides = [1, 1]} : vector<2x128xf32> to vector<2x32xf32>
    %218 = vector.extract_strided_slice %213 {offsets = [0, 96], sizes = [2, 32], strides = [1, 1]} : vector<2x128xf32> to vector<2x32xf32>
    %219 = arith.mulf %216, %202 : vector<2x32xf32>
    %220 = arith.mulf %215, %217 : vector<2x32xf32>
    %221 = arith.addf %219, %220 : vector<2x32xf32>
    %222 = math.tanh %221 : vector<2x32xf32>
    %223 = arith.mulf %218, %222 : vector<2x32xf32>
    %224 = vector.extract_strided_slice %181 {offsets = [0, 2, 0], sizes = [2, 1, 128], strides = [1, 1, 1]} : vector<2x8x128xf32> to vector<2x1x128xf32>
    %225 = vector.shape_cast %224 : vector<2x1x128xf32> to vector<2x128xf32>
    %cst_46 = arith.constant dense<0.000000e+00> : vector<2x128xf32>
    %226 = tpu.matmul %223, %175, %cst_46 {dimension_numbers = #tpu.dot_dimension_numbers<[1], [0], [0], [1], [0, 0, 1, 1], [], []>} : vector<2x32xf32>, vector<32x128xf32>, vector<2x128xf32> -> vector<2x128xf32>
    %227 = arith.addf %225, %226 : vector<2x128xf32>
    %228 = arith.negf %227 : vector<2x128xf32>
    %229 = math.exp %228 : vector<2x128xf32>
    %cst_47 = arith.constant 1.000000e+00 : f32
    %230 = vector.broadcast %cst_47 : f32 to vector<2x128xf32>
    %231 = arith.addf %230, %229 : vector<2x128xf32>
    %232 = arith.divf %230, %231 : vector<2x128xf32>
    %233 = math.tanh %227 : vector<2x128xf32>
    %234 = vector.extract_strided_slice %232 {offsets = [0, 0], sizes = [2, 32], strides = [1, 1]} : vector<2x128xf32> to vector<2x32xf32>
    %235 = vector.extract_strided_slice %232 {offsets = [0, 32], sizes = [2, 32], strides = [1, 1]} : vector<2x128xf32> to vector<2x32xf32>
    %236 = vector.extract_strided_slice %233 {offsets = [0, 64], sizes = [2, 32], strides = [1, 1]} : vector<2x128xf32> to vector<2x32xf32>
    %237 = vector.extract_strided_slice %232 {offsets = [0, 96], sizes = [2, 32], strides = [1, 1]} : vector<2x128xf32> to vector<2x32xf32>
    %238 = arith.mulf %235, %221 : vector<2x32xf32>
    %239 = arith.mulf %234, %236 : vector<2x32xf32>
    %240 = arith.addf %238, %239 : vector<2x32xf32>
    %241 = math.tanh %240 : vector<2x32xf32>
    %242 = arith.mulf %237, %241 : vector<2x32xf32>
    %243 = vector.extract_strided_slice %181 {offsets = [0, 3, 0], sizes = [2, 1, 128], strides = [1, 1, 1]} : vector<2x8x128xf32> to vector<2x1x128xf32>
    %244 = vector.shape_cast %243 : vector<2x1x128xf32> to vector<2x128xf32>
    %cst_48 = arith.constant dense<0.000000e+00> : vector<2x128xf32>
    %245 = tpu.matmul %242, %175, %cst_48 {dimension_numbers = #tpu.dot_dimension_numbers<[1], [0], [0], [1], [0, 0, 1, 1], [], []>} : vector<2x32xf32>, vector<32x128xf32>, vector<2x128xf32> -> vector<2x128xf32>
    %246 = arith.addf %244, %245 : vector<2x128xf32>
    %247 = arith.negf %246 : vector<2x128xf32>
    %248 = math.exp %247 : vector<2x128xf32>
    %cst_49 = arith.constant 1.000000e+00 : f32
    %249 = vector.broadcast %cst_49 : f32 to vector<2x128xf32>
    %250 = arith.addf %249, %248 : vector<2x128xf32>
    %251 = arith.divf %249, %250 : vector<2x128xf32>
    %252 = math.tanh %246 : vector<2x128xf32>
    %253 = vector.extract_strided_slice %251 {offsets = [0, 0], sizes = [2, 32], strides = [1, 1]} : vector<2x128xf32> to vector<2x32xf32>
    %254 = vector.extract_strided_slice %251 {offsets = [0, 32], sizes = [2, 32], strides = [1, 1]} : vector<2x128xf32> to vector<2x32xf32>
    %255 = vector.extract_strided_slice %252 {offsets = [0, 64], sizes = [2, 32], strides = [1, 1]} : vector<2x128xf32> to vector<2x32xf32>
    %256 = vector.extract_strided_slice %251 {offsets = [0, 96], sizes = [2, 32], strides = [1, 1]} : vector<2x128xf32> to vector<2x32xf32>
    %257 = arith.mulf %254, %240 : vector<2x32xf32>
    %258 = arith.mulf %253, %255 : vector<2x32xf32>
    %259 = arith.addf %257, %258 : vector<2x32xf32>
    %260 = math.tanh %259 : vector<2x32xf32>
    %261 = arith.mulf %256, %260 : vector<2x32xf32>
    %262 = vector.extract_strided_slice %181 {offsets = [0, 4, 0], sizes = [2, 1, 128], strides = [1, 1, 1]} : vector<2x8x128xf32> to vector<2x1x128xf32>
    %263 = vector.shape_cast %262 : vector<2x1x128xf32> to vector<2x128xf32>
    %cst_50 = arith.constant dense<0.000000e+00> : vector<2x128xf32>
    %264 = tpu.matmul %261, %175, %cst_50 {dimension_numbers = #tpu.dot_dimension_numbers<[1], [0], [0], [1], [0, 0, 1, 1], [], []>} : vector<2x32xf32>, vector<32x128xf32>, vector<2x128xf32> -> vector<2x128xf32>
    %265 = arith.addf %263, %264 : vector<2x128xf32>
    %266 = arith.negf %265 : vector<2x128xf32>
    %267 = math.exp %266 : vector<2x128xf32>
    %cst_51 = arith.constant 1.000000e+00 : f32
    %268 = vector.broadcast %cst_51 : f32 to vector<2x128xf32>
    %269 = arith.addf %268, %267 : vector<2x128xf32>
    %270 = arith.divf %268, %269 : vector<2x128xf32>
    %271 = math.tanh %265 : vector<2x128xf32>
    %272 = vector.extract_strided_slice %270 {offsets = [0, 0], sizes = [2, 32], strides = [1, 1]} : vector<2x128xf32> to vector<2x32xf32>
    %273 = vector.extract_strided_slice %270 {offsets = [0, 32], sizes = [2, 32], strides = [1, 1]} : vector<2x128xf32> to vector<2x32xf32>
    %274 = vector.extract_strided_slice %271 {offsets = [0, 64], sizes = [2, 32], strides = [1, 1]} : vector<2x128xf32> to vector<2x32xf32>
    %275 = vector.extract_strided_slice %270 {offsets = [0, 96], sizes = [2, 32], strides = [1, 1]} : vector<2x128xf32> to vector<2x32xf32>
    %276 = arith.mulf %273, %259 : vector<2x32xf32>
    %277 = arith.mulf %272, %274 : vector<2x32xf32>
    %278 = arith.addf %276, %277 : vector<2x32xf32>
    %279 = math.tanh %278 : vector<2x32xf32>
    %280 = arith.mulf %275, %279 : vector<2x32xf32>
    %281 = vector.extract_strided_slice %181 {offsets = [0, 5, 0], sizes = [2, 1, 128], strides = [1, 1, 1]} : vector<2x8x128xf32> to vector<2x1x128xf32>
    %282 = vector.shape_cast %281 : vector<2x1x128xf32> to vector<2x128xf32>
    %cst_52 = arith.constant dense<0.000000e+00> : vector<2x128xf32>
    %283 = tpu.matmul %280, %175, %cst_52 {dimension_numbers = #tpu.dot_dimension_numbers<[1], [0], [0], [1], [0, 0, 1, 1], [], []>} : vector<2x32xf32>, vector<32x128xf32>, vector<2x128xf32> -> vector<2x128xf32>
    %284 = arith.addf %282, %283 : vector<2x128xf32>
    %285 = arith.negf %284 : vector<2x128xf32>
    %286 = math.exp %285 : vector<2x128xf32>
    %cst_53 = arith.constant 1.000000e+00 : f32
    %287 = vector.broadcast %cst_53 : f32 to vector<2x128xf32>
    %288 = arith.addf %287, %286 : vector<2x128xf32>
    %289 = arith.divf %287, %288 : vector<2x128xf32>
    %290 = math.tanh %284 : vector<2x128xf32>
    %291 = vector.extract_strided_slice %289 {offsets = [0, 0], sizes = [2, 32], strides = [1, 1]} : vector<2x128xf32> to vector<2x32xf32>
    %292 = vector.extract_strided_slice %289 {offsets = [0, 32], sizes = [2, 32], strides = [1, 1]} : vector<2x128xf32> to vector<2x32xf32>
    %293 = vector.extract_strided_slice %290 {offsets = [0, 64], sizes = [2, 32], strides = [1, 1]} : vector<2x128xf32> to vector<2x32xf32>
    %294 = vector.extract_strided_slice %289 {offsets = [0, 96], sizes = [2, 32], strides = [1, 1]} : vector<2x128xf32> to vector<2x32xf32>
    %295 = arith.mulf %292, %278 : vector<2x32xf32>
    %296 = arith.mulf %291, %293 : vector<2x32xf32>
    %297 = arith.addf %295, %296 : vector<2x32xf32>
    %298 = math.tanh %297 : vector<2x32xf32>
    %299 = arith.mulf %294, %298 : vector<2x32xf32>
    %300 = vector.extract_strided_slice %181 {offsets = [0, 6, 0], sizes = [2, 1, 128], strides = [1, 1, 1]} : vector<2x8x128xf32> to vector<2x1x128xf32>
    %301 = vector.shape_cast %300 : vector<2x1x128xf32> to vector<2x128xf32>
    %cst_54 = arith.constant dense<0.000000e+00> : vector<2x128xf32>
    %302 = tpu.matmul %299, %175, %cst_54 {dimension_numbers = #tpu.dot_dimension_numbers<[1], [0], [0], [1], [0, 0, 1, 1], [], []>} : vector<2x32xf32>, vector<32x128xf32>, vector<2x128xf32> -> vector<2x128xf32>
    %303 = arith.addf %301, %302 : vector<2x128xf32>
    %304 = arith.negf %303 : vector<2x128xf32>
    %305 = math.exp %304 : vector<2x128xf32>
    %cst_55 = arith.constant 1.000000e+00 : f32
    %306 = vector.broadcast %cst_55 : f32 to vector<2x128xf32>
    %307 = arith.addf %306, %305 : vector<2x128xf32>
    %308 = arith.divf %306, %307 : vector<2x128xf32>
    %309 = math.tanh %303 : vector<2x128xf32>
    %310 = vector.extract_strided_slice %308 {offsets = [0, 0], sizes = [2, 32], strides = [1, 1]} : vector<2x128xf32> to vector<2x32xf32>
    %311 = vector.extract_strided_slice %308 {offsets = [0, 32], sizes = [2, 32], strides = [1, 1]} : vector<2x128xf32> to vector<2x32xf32>
    %312 = vector.extract_strided_slice %309 {offsets = [0, 64], sizes = [2, 32], strides = [1, 1]} : vector<2x128xf32> to vector<2x32xf32>
    %313 = vector.extract_strided_slice %308 {offsets = [0, 96], sizes = [2, 32], strides = [1, 1]} : vector<2x128xf32> to vector<2x32xf32>
    %314 = arith.mulf %311, %297 : vector<2x32xf32>
    %315 = arith.mulf %310, %312 : vector<2x32xf32>
    %316 = arith.addf %314, %315 : vector<2x32xf32>
    %317 = math.tanh %316 : vector<2x32xf32>
    %318 = arith.mulf %313, %317 : vector<2x32xf32>
    %319 = vector.extract_strided_slice %181 {offsets = [0, 7, 0], sizes = [2, 1, 128], strides = [1, 1, 1]} : vector<2x8x128xf32> to vector<2x1x128xf32>
    %320 = vector.shape_cast %319 : vector<2x1x128xf32> to vector<2x128xf32>
    %cst_56 = arith.constant dense<0.000000e+00> : vector<2x128xf32>
    %321 = tpu.matmul %318, %175, %cst_56 {dimension_numbers = #tpu.dot_dimension_numbers<[1], [0], [0], [1], [0, 0, 1, 1], [], []>} : vector<2x32xf32>, vector<32x128xf32>, vector<2x128xf32> -> vector<2x128xf32>
    %322 = arith.addf %320, %321 : vector<2x128xf32>
    %323 = arith.negf %322 : vector<2x128xf32>
    %324 = math.exp %323 : vector<2x128xf32>
    %cst_57 = arith.constant 1.000000e+00 : f32
    %325 = vector.broadcast %cst_57 : f32 to vector<2x128xf32>
    %326 = arith.addf %325, %324 : vector<2x128xf32>
    %327 = arith.divf %325, %326 : vector<2x128xf32>
    %328 = math.tanh %322 : vector<2x128xf32>
    %329 = vector.extract_strided_slice %327 {offsets = [0, 0], sizes = [2, 32], strides = [1, 1]} : vector<2x128xf32> to vector<2x32xf32>
    %330 = vector.extract_strided_slice %327 {offsets = [0, 32], sizes = [2, 32], strides = [1, 1]} : vector<2x128xf32> to vector<2x32xf32>
    %331 = vector.extract_strided_slice %328 {offsets = [0, 64], sizes = [2, 32], strides = [1, 1]} : vector<2x128xf32> to vector<2x32xf32>
    %332 = vector.extract_strided_slice %327 {offsets = [0, 96], sizes = [2, 32], strides = [1, 1]} : vector<2x128xf32> to vector<2x32xf32>
    %333 = arith.mulf %330, %316 : vector<2x32xf32>
    %334 = arith.mulf %329, %331 : vector<2x32xf32>
    %335 = arith.addf %333, %334 : vector<2x32xf32>
    %336 = math.tanh %335 : vector<2x32xf32>
    %337 = arith.mulf %332, %336 : vector<2x32xf32>
    %338 = vector.shape_cast %204 : vector<2x32xf32> to vector<2x1x32xf32>
    %339 = vector.shape_cast %223 : vector<2x32xf32> to vector<2x1x32xf32>
    %340 = vector.shape_cast %242 : vector<2x32xf32> to vector<2x1x32xf32>
    %341 = vector.shape_cast %261 : vector<2x32xf32> to vector<2x1x32xf32>
    %342 = vector.shape_cast %280 : vector<2x32xf32> to vector<2x1x32xf32>
    %343 = vector.shape_cast %299 : vector<2x32xf32> to vector<2x1x32xf32>
    %344 = vector.shape_cast %318 : vector<2x32xf32> to vector<2x1x32xf32>
    %345 = vector.shape_cast %337 : vector<2x32xf32> to vector<2x1x32xf32>
    %346 = tpu.concatenate %338, %339, %340, %341, %342, %343, %344, %345 in 1 : vector<2x1x32xf32>, vector<2x1x32xf32>, vector<2x1x32xf32>, vector<2x1x32xf32>, vector<2x1x32xf32>, vector<2x1x32xf32>, vector<2x1x32xf32>, vector<2x1x32xf32> -> vector<2x8x32xf32>
    %c0_58 = arith.constant 0 : index
    %c0_59 = arith.constant 0 : index
    %c0_60 = arith.constant 0 : index
    %347 = vector.load %arg9[%c0_58, %c0_59, %c0_60] : memref<2x8x32xf32, #tpu.memory_space<vmem>>, vector<2x8x32xf32>
    tpu.vector_store %arg9[%c0_58, %c0_59, %c0_60], %346 {strides = array<i32>} : memref<2x8x32xf32, #tpu.memory_space<vmem>>, vector<2x8x32xf32>,
    return
  }
}

</mosaic_0001>

<llo_original>
// kernel: tpu_custom_call.1
$region0: #{tpu_custom_call.1}
  #allocation0 [shape = 'u32[]', space=smem, size = 0x4, offset = 0x4, fixed_abs, tag = 'smem constant byte address 0x4 - core index']
  #allocation1 [shape = 'u32[72,128]{1,0:T(1,128)}', space=vmem, size = 0x9000, scoped, tag = 'internal scratch']
  %s0 = inlined_call_operand.hbm [shape: f32[2,8,16], index: 0, kind: input, shape index: {}]
  %s1 = inlined_call_operand.hbm [shape: f32[2,2,32], index: 1, kind: input, shape index: {}]
  %s2 = inlined_call_operand.hbm [shape: f32[2,2,32], index: 2, kind: input, shape index: {}]
  %s3 = inlined_call_operand.hbm [shape: f32[16,128], index: 3, kind: input, shape index: {}]
  %s4 = inlined_call_operand.hbm [shape: f32[32,128], index: 4, kind: input, shape index: {}]
  %s5 = inlined_call_operand.vmem [shape: f32[1,128], index: 5, kind: input, shape index: {}]
  %s6 = inlined_call_operand.hbm [shape: f32[32,128], index: 6, kind: input, shape index: {}]
  %s7 = inlined_call_operand.hbm [shape: f32[32,128], index: 7, kind: input, shape index: {}]
  %s8 = inlined_call_operand.vmem [shape: f32[1,128], index: 8, kind: input, shape index: {}]
  %s9 = inlined_call_operand.hbm [shape: f32[2,8,32], index: 9, kind: output, shape index: {}]
  %s10 = sld [smem:[#allocation0]]
  $region74: #{tpu_custom_call.1} parent=0
    _
  %s12 = ssub.s32 1, %s10
  %s13 = scalar_select 0, %s12, %s10
  $region1: #{tpu_custom_call.1} parent=0
    #allocation2 [shape = 'u8[8192]{0}', space=vmem, size = 0x2000, scoped, tag = 'input window, operand 0, single buffered']
    #allocation3 [shape = 's32[1]{0}', space=sflag, size = 0x4, scoped, tag = 'scoped memory for tpu_custom_call.1']
    #allocation4 [shape = 's32[1]{0}', space=sflag, size = 0x4, scoped, tag = 'scoped memory for tpu_custom_call.1']
    #allocation5 [shape = 'u8[2048]{0}', space=vmem, size = 0x800, scoped, tag = 'input window, operand 1, single buffered']
    #allocation6 [shape = 's32[1]{0}', space=sflag, size = 0x4, scoped, tag = 'scoped memory for tpu_custom_call.1']
    #allocation7 [shape = 'u8[2048]{0}', space=vmem, size = 0x800, scoped, tag = 'input window, operand 2, single buffered']
    #allocation8 [shape = 'u8[8192]{0}', space=vmem, size = 0x2000, scoped, tag = 'input window, operand 3, single buffered']
    #allocation9 [shape = 's32[1]{0}', space=sflag, size = 0x4, scoped, tag = 'scoped memory for tpu_custom_call.1']
    #allocation10 [shape = 'u8[16384]{0}', space=vmem, size = 0x4000, scoped, tag = 'input window, operand 4, single buffered']
    #allocation11 [shape = 'u8[16384]{0}', space=vmem, size = 0x4000, scoped, tag = 'input window, operand 6, single buffered']
    #allocation12 [shape = 's32[1]{0}', space=sflag, size = 0x4, scoped, tag = 'scoped memory for tpu_custom_call.1']
    #allocation13 [shape = 'u8[16384]{0}', space=vmem, size = 0x4000, scoped, tag = 'input window, operand 7, single buffered']
    #allocation14 [shape = 'u8[8192]{0}', space=vmem, size = 0x2000, scoped, tag = 'output window, operand 0, single buffered']
    %14 = vsyncpa [#allocation3], 0
    %15 = vsyncpa [#allocation6], 0
    %16 = vsyncpa [#allocation9], 0
    %17 = vsyncpa [#allocation12], 0
    %18 = vsyncpa [#allocation4], 0
    // Predicated region
    $region2: #{tpu_custom_call.1} parent=1 // pred_check
      _
    $region3: #{tpu_custom_call.1} parent=1 // pred_check_branch
      %20 = sbr.rel (0) target = $region5
    $region4: #{tpu_custom_call.1} parent=1 // pred_region
      %22 = vsyncadd [#allocation3], 0
      %s23 = sshll.u32 %s0, 4
      %s24 = int_to_ptr.hbm [resolvable:$true] %s23
      %s25 = sshll.u32 [#allocation2], 4
      %s26 = int_to_ptr.vmem [resolvable:$true] %s25
      %31 = dma.hbm_to_vmem [thread:$0]  %s24, 256, %s26, [#allocation3], 128, 128, 8
    $region5: #{tpu_custom_call.1} parent=1 // pred_fallthru
      _
    // Predicated region
    $region6: #{tpu_custom_call.1} parent=1 // pred_check
      _
    $region7: #{tpu_custom_call.1} parent=1 // pred_check_branch
      %33 = sbr.rel (0) target = $region9
    $region8: #{tpu_custom_call.1} parent=1 // pred_region
      %35 = vsyncadd [#allocation6], 0
      %s36 = sshll.u32 %s1, 4
      %s37 = int_to_ptr.hbm [resolvable:$true] %s36
      %s38 = sshll.u32 [#allocation5], 4
      %s39 = int_to_ptr.vmem [resolvable:$true] %s38
      %44 = dma.hbm_to_vmem [thread:$0]  %s37, 64, %s39, [#allocation6], 32, 32, 2
    $region9: #{tpu_custom_call.1} parent=1 // pred_fallthru
      _
    // Predicated region
    $region10: #{tpu_custom_call.1} parent=1 // pred_check
      _
    $region11: #{tpu_custom_call.1} parent=1 // pred_check_branch
      %46 = sbr.rel (0) target = $region13
    $region12: #{tpu_custom_call.1} parent=1 // pred_region
      %48 = vsyncadd [#allocation6], 0
      %s49 = sshll.u32 %s2, 4
      %s50 = int_to_ptr.hbm [resolvable:$true] %s49
      %s51 = sshll.u32 [#allocation7], 4
      %s52 = int_to_ptr.vmem [resolvable:$true] %s51
      %57 = dma.hbm_to_vmem [thread:$0]  %s50, 64, %s52, [#allocation6], 32, 32, 2
    $region13: #{tpu_custom_call.1} parent=1 // pred_fallthru
      _
    // Predicated region
    $region14: #{tpu_custom_call.1} parent=1 // pred_check
      _
    $region15: #{tpu_custom_call.1} parent=1 // pred_check_branch
      %59 = sbr.rel (0) target = $region17
    $region16: #{tpu_custom_call.1} parent=1 // pred_region
      %61 = vsyncadd [#allocation9], 0
      %s62 = sshll.u32 %s3, 4
      %s63 = int_to_ptr.hbm [resolvable:$true] %s62
      %s64 = sshll.u32 [#allocation8], 4
      %s65 = int_to_ptr.vmem [resolvable:$true] %s64
      %70 = dma.hbm_to_vmem [thread:$0]  %s63, 256, %s65, [#allocation9], 128, 128, 8
    $region17: #{tpu_custom_call.1} parent=1 // pred_fallthru
      _
    // Predicated region
    $region18: #{tpu_custom_call.1} parent=1 // pred_check
      _
    $region19: #{tpu_custom_call.1} parent=1 // pred_check_branch
      %72 = sbr.rel (0) target = $region21
    $region20: #{tpu_custom_call.1} parent=1 // pred_region
      %74 = vsyncadd [#allocation9], 0
      %s75 = sshll.u32 %s4, 4
      %s76 = int_to_ptr.hbm [resolvable:$true] %s75
      %s77 = sshll.u32 [#allocation10], 4
      %s78 = int_to_ptr.vmem [resolvable:$true] %s77
      %83 = dma.hbm_to_vmem [thread:$0]  %s76, 512, %s78, [#allocation9], 128, 128, 8
    $region21: #{tpu_custom_call.1} parent=1 // pred_fallthru
      _
    // Predicated region
    $region22: #{tpu_custom_call.1} parent=1 // pred_check
      _
    $region23: #{tpu_custom_call.1} parent=1 // pred_check_branch
      %85 = sbr.rel (0) target = $region25
    $region24: #{tpu_custom_call.1} parent=1 // pred_region
      _
    $region25: #{tpu_custom_call.1} parent=1 // pred_fallthru
      _
    // Predicated region
    $region26: #{tpu_custom_call.1} parent=1 // pred_check
      _
    $region27: #{tpu_custom_call.1} parent=1 // pred_check_branch
      %87 = sbr.rel (0) target = $region29
    $region28: #{tpu_custom_call.1} parent=1 // pred_region
      %89 = vsyncadd [#allocation12], 0
      %s90 = sshll.u32 %s6, 4
      %s91 = int_to_ptr.hbm [resolvable:$true] %s90
      %s92 = sshll.u32 [#allocation11], 4
      %s93 = int_to_ptr.vmem [resolvable:$true] %s92
      %98 = dma.hbm_to_vmem [thread:$0]  %s91, 512, %s93, [#allocation12], 128, 128, 8
    $region29: #{tpu_custom_call.1} parent=1 // pred_fallthru
      _
    // Predicated region
    $region30: #{tpu_custom_call.1} parent=1 // pred_check
      _
    $region31: #{tpu_custom_call.1} parent=1 // pred_check_branch
      %100 = sbr.rel (0) target = $region33
    $region32: #{tpu_custom_call.1} parent=1 // pred_region
      %102 = vsyncadd [#allocation12], 0
      %s103 = sshll.u32 %s7, 4
      %s104 = int_to_ptr.hbm [resolvable:$true] %s103
      %s105 = sshll.u32 [#allocation13], 4
      %s106 = int_to_ptr.vmem [resolvable:$true] %s105
      %111 = dma.hbm_to_vmem [thread:$0]  %s104, 512, %s106, [#allocation12], 128, 128, 8
    $region33: #{tpu_custom_call.1} parent=1 // pred_fallthru
      _
    // Predicated region
    $region34: #{tpu_custom_call.1} parent=1 // pred_check
      _
    $region35: #{tpu_custom_call.1} parent=1 // pred_check_branch
      %113 = sbr.rel (0) target = $region37
    $region36: #{tpu_custom_call.1} parent=1 // pred_region
      _
    $region37: #{tpu_custom_call.1} parent=1 // pred_fallthru
      _
    // Predicated region
    $region38: #{tpu_custom_call.1} parent=1 // pred_check
      _
    $region39: #{tpu_custom_call.1} parent=1 // pred_check_branch
      %115 = sbr.rel (0) target = $region41
    $region40: #{tpu_custom_call.1} parent=1 // pred_region
      %117 = dma.done [#allocation3], 256
    $region41: #{tpu_custom_call.1} parent=1 // pred_fallthru
      _
    // Predicated region
    $region42: #{tpu_custom_call.1} parent=1 // pred_check
      _
    $region43: #{tpu_custom_call.1} parent=1 // pred_check_branch
      %119 = sbr.rel (0) target = $region45
    $region44: #{tpu_custom_call.1} parent=1 // pred_region
      %121 = dma.done [#allocation6], 64
    $region45: #{tpu_custom_call.1} parent=1 // pred_fallthru
      _
    // Predicated region
    $region46: #{tpu_custom_call.1} parent=1 // pred_check
      _
    $region47: #{tpu_custom_call.1} parent=1 // pred_check_branch
      %123 = sbr.rel (0) target = $region49
    $region48: #{tpu_custom_call.1} parent=1 // pred_region
      %125 = dma.done [#allocation6], 64
    $region49: #{tpu_custom_call.1} parent=1 // pred_fallthru
      _
    // Predicated region
    $region50: #{tpu_custom_call.1} parent=1 // pred_check
      _
    $region51: #{tpu_custom_call.1} parent=1 // pred_check_branch
      %127 = sbr.rel (0) target = $region53
    $region52: #{tpu_custom_call.1} parent=1 // pred_region
      %129 = dma.done [#allocation9], 256
    $region53: #{tpu_custom_call.1} parent=1 // pred_fallthru
      _
    // Predicated region
    $region54: #{tpu_custom_call.1} parent=1 // pred_check
      _
    $region55: #{tpu_custom_call.1} parent=1 // pred_check_branch
      %131 = sbr.rel (0) target = $region57
    $region56: #{tpu_custom_call.1} parent=1 // pred_region
      %133 = dma.done [#allocation9], 512
    $region57: #{tpu_custom_call.1} parent=1 // pred_fallthru
      _
    // Predicated region
    $region58: #{tpu_custom_call.1} parent=1 // pred_check
      _
    $region59: #{tpu_custom_call.1} parent=1 // pred_check_branch
      %135 = sbr.rel (0) target = $region61
    $region60: #{tpu_custom_call.1} parent=1 // pred_region
      %137 = dma.done [#allocation12], 512
    $region61: #{tpu_custom_call.1} parent=1 // pred_fallthru
      _
    // Predicated region
    $region62: #{tpu_custom_call.1} parent=1 // pred_check
      _
    $region63: #{tpu_custom_call.1} parent=1 // pred_check_branch
      %139 = sbr.rel (0) target = $region65
    $region64: #{tpu_custom_call.1} parent=1 // pred_region
      %141 = dma.done [#allocation12], 512
    $region65: #{tpu_custom_call.1} parent=1 // pred_fallthru
      _
    %v142 = vld [vmem:[#allocation2] sm:$0xff]
    %v143 = vld [vmem:[#allocation2 + $0x8] sm:$0xff]
    %v144 = vld [vmem:[#allocation8] sm:$0xff]
    %v145 = vld [vmem:[#allocation8 + $0x8] sm:$0xff]
    %v146 = vld [vmem:[#allocation10] sm:$0xff]
    %v147 = vld [vmem:[#allocation10 + $0x8] sm:$0xff]
    %v148 = vld [vmem:[#allocation10 + $0x10] sm:$0xff]
    %v149 = vld [vmem:[#allocation10 + $0x18] sm:$0xff]
    %v150 = vld [vmem:[%s5] sm:$0x1]
    %v152 = vperm.slane %v150, 0
    %vm154 = vcmask 130048
    %v156 = vsel %vm154, %v142, 0
    %v159 = vsel %vm154, %v143, 0
    %161 = vmatpush.msra.mxu0 0.0
    %162 = vmatpush.msra.mxu0 0.0
    %163 = vmatpush.msra.mxu0 0.0
    %164 = vmatpush.msra.mxu0 0.0
    %165 = vmatpush.msra.mxu0 0.0
    %166 = vmatpush.msra.mxu0 0.0
    %167 = vmatpush.msra.mxu0 0.0
    %168 = vmatpush.msra.mxu0 0.0
    %169 = vmatpush.msra.mxu0 0.0
    %170 = vmatpush.msra.mxu0 0.0
    %171 = vmatpush.msra.mxu0 0.0
    %172 = vmatpush.msra.mxu0 0.0
    %173 = vmatpush.msra.mxu0 0.0
    %174 = vmatpush.msra.mxu0 0.0
    %175 = vmatpush.msra.mxu0 %v145
    %176 = vmatpush.msra.mxu0 %v144
    %177 = vmatmul.f32.gmra.mxu0 %v156
    %v178 = vpop.f32.mrf.mxu0
    %v179 = vadd.f32 %v152, %v178
    %180 = vmatmul.f32.gmra.mxu0 %v159
    %v181 = vpop.f32.mrf.mxu0
    %v182 = vadd.f32 %v152, %v181
    %183 = vdwg.mxu0
    %v184 = vld [vmem:[#allocation5] sm:$0x3]
    %v185 = vld [vmem:[#allocation7] sm:$0x3]
    %vm186 = vcmask 261120
    %v188 = vsel %vm186, %v184, 0
    %190 = vmatpush.msra.mxu0 0.0
    %191 = vmatpush.msra.mxu0 0.0
    %192 = vmatpush.msra.mxu0 0.0
    %193 = vmatpush.msra.mxu0 0.0
    %194 = vmatpush.msra.mxu0 0.0
    %195 = vmatpush.msra.mxu0 0.0
    %196 = vmatpush.msra.mxu0 0.0
    %197 = vmatpush.msra.mxu0 0.0
    %198 = vmatpush.msra.mxu0 0.0
    %199 = vmatpush.msra.mxu0 0.0
    %200 = vmatpush.msra.mxu0 0.0
    %201 = vmatpush.msra.mxu0 0.0
    %202 = vmatpush.msra.mxu0 %v149
    %203 = vmatpush.msra.mxu0 %v148
    %204 = vmatpush.msra.mxu0 %v147
    %205 = vmatpush.msra.mxu0 %v146
    %206 = vmatmul.f32.gmra.mxu0 %v188
    %v207 = vpop.f32.mrf.mxu0
    %v208 = vadd.f32 0.0, %v207
    %209 = vdwg.mxu0
    %v211 = vrot.slane %v208, 1
    %v214 = vadd.f32 %v179, %v208
    %v215 = vadd.f32 %v182, %v211
    %v216 = vxor.u32 %v214, 2147483648
    %v217 = vxor.u32 %v215, 2147483648
    %v218 = vmul.f32 %v216, 1.442695
    %v219 = vpow.pop %v218
    %v220 = vmul.f32 %v217, 1.442695
    %v221 = vpow.pop %v220
    %v222 = vadd.f32 %v219, 1.0
    %v223 = vadd.f32 %v221, 1.0
    %v224 = vrcp.pop %v222
    %v225 = vmul.f32 %v222, %v224
    %v226 = vsub.f32 1.0, %v225
    %v227 = vmul.f32 %v224, %v226
    %v228 = vadd.f32 %v224, %v227
    %vm229 = vweird.f32 %v222
    %vm230 = vweird.f32 %v224
    %vm231 = vmor %vm229, %vm230
    %v232 = vsel %vm231, %v224, %v228
    %v233 = vand.u32 2147483647, %v222
    %vm234 = vcmp.eq.f32.partialorder %v233, 8.507059e+37
    %v235 = vand.u32 %v222, 2147483648
    %v236 = vor.u32 1.1754944e-38, %v235
    %v237 = vsel %vm234, %v236, %v232
    %v238 = vmul.f32 1.0, %v237
    %v239 = vrcp.pop %v223
    %v240 = vmul.f32 %v223, %v239
    %v241 = vsub.f32 1.0, %v240
    %v242 = vmul.f32 %v239, %v241
    %v243 = vadd.f32 %v239, %v242
    %vm244 = vweird.f32 %v223
    %vm245 = vweird.f32 %v239
    %vm246 = vmor %vm244, %vm245
    %v247 = vsel %vm246, %v239, %v243
    %v248 = vand.u32 2147483647, %v223
    %vm249 = vcmp.eq.f32.partialorder %v248, 8.507059e+37
    %v250 = vand.u32 %v223, 2147483648
    %v251 = vor.u32 1.1754944e-38, %v250
    %v252 = vsel %vm249, %v251, %v247
    %v253 = vmul.f32 1.0, %v252
    %v254 = vtanh.pop %v214
    %v255 = vtanh.pop %v215
    %v257 = vrot.slane %v185, 1
    %258 = vrot.lane.b32.xlu0 %v185, 32
    %v259 = vpop.permute.xlu0 %258
    %260 = vrot.lane.b32.xlu0 %v257, 32
    %v261 = vpop.permute.xlu0 %260
    %v264 = vmul.f32 %v238, %v259
    %v265 = vmul.f32 %v253, %v261
    %268 = vrot.lane.b32.xlu0 %v254, 64
    %v269 = vpop.permute.xlu0 %268
    %270 = vrot.lane.b32.xlu0 %v255, 64
    %v271 = vpop.permute.xlu0 %270
    %v274 = vmul.f32 %v238, %v269
    %v275 = vmul.f32 %v253, %v271
    %278 = vrot.lane.b32.xlu0 %v274, 32
    %v279 = vpop.permute.xlu0 %278
    %280 = vrot.lane.b32.xlu0 %v275, 32
    %v281 = vpop.permute.xlu0 %280
    %v284 = vadd.f32 %v264, %v279
    %v285 = vadd.f32 %v265, %v281
    %v286 = vtanh.pop %v284
    %v287 = vtanh.pop %v285
    %290 = vrot.lane.b32.xlu0 %v286, 64
    %v291 = vpop.permute.xlu0 %290
    %292 = vrot.lane.b32.xlu0 %v287, 64
    %v293 = vpop.permute.xlu0 %292
    %v296 = vmul.f32 %v238, %v291
    %v297 = vmul.f32 %v253, %v293
    %v300 = vrot.slane %v297, 7
    %vm301 = vcmask 1041409
    %v302 = vsel %vm301, %v300, %v296
    %303 = vrot.lane.b32.xlu0 %v302, 32
    %v304 = vpop.permute.xlu0 %303
    %v305 = vsel %vm186, %v304, 0
    %307 = vmatpush.msra.mxu0 0.0
    %308 = vmatpush.msra.mxu0 0.0
    %309 = vmatpush.msra.mxu0 0.0
    %310 = vmatpush.msra.mxu0 0.0
    %311 = vmatpush.msra.mxu0 0.0
    %312 = vmatpush.msra.mxu0 0.0
    %313 = vmatpush.msra.mxu0 0.0
    %314 = vmatpush.msra.mxu0 0.0
    %315 = vmatpush.msra.mxu0 0.0
    %316 = vmatpush.msra.mxu0 0.0
    %317 = vmatpush.msra.mxu0 0.0
    %318 = vmatpush.msra.mxu0 0.0
    %319 = vmatpush.msra.mxu0 %v149
    %320 = vmatpush.msra.mxu0 %v148
    %321 = vmatpush.msra.mxu0 %v147
    %322 = vmatpush.msra.mxu0 %v146
    %323 = vmatmul.f32.gmra.mxu0 %v305
    %v324 = vpop.f32.mrf.mxu0
    %v325 = vadd.f32 0.0, %v324
    %326 = vdwg.mxu0
    %v328 = vrot.slane %v325, 7
    %v331 = vadd.f32 %v179, %v328
    %v332 = vadd.f32 %v182, %v325
    %v333 = vxor.u32 %v331, 2147483648
    %v334 = vxor.u32 %v332, 2147483648
    %v335 = vmul.f32 %v333, 1.442695
    %v336 = vpow.pop %v335
    %v337 = vmul.f32 %v334, 1.442695
    %v338 = vpow.pop %v337
    %v339 = vadd.f32 %v336, 1.0
    %v340 = vadd.f32 %v338, 1.0
    %v341 = vrcp.pop %v339
    %v342 = vmul.f32 %v339, %v341
    %v343 = vsub.f32 1.0, %v342
    %v344 = vmul.f32 %v341, %v343
    %v345 = vadd.f32 %v341, %v344
    %vm346 = vweird.f32 %v339
    %vm347 = vweird.f32 %v341
    %vm348 = vmor %vm346, %vm347
    %v349 = vsel %vm348, %v341, %v345
    %v350 = vand.u32 2147483647, %v339
    %vm351 = vcmp.eq.f32.partialorder %v350, 8.507059e+37
    %v352 = vand.u32 %v339, 2147483648
    %v353 = vor.u32 1.1754944e-38, %v352
    %v354 = vsel %vm351, %v353, %v349
    %v355 = vmul.f32 1.0, %v354
    %v356 = vrcp.pop %v340
    %v357 = vmul.f32 %v340, %v356
    %v358 = vsub.f32 1.0, %v357
    %v359 = vmul.f32 %v356, %v358
    %v360 = vadd.f32 %v356, %v359
    %vm361 = vweird.f32 %v340
    %vm362 = vweird.f32 %v356
    %vm363 = vmor %vm361, %vm362
    %v364 = vsel %vm363, %v356, %v360
    %v365 = vand.u32 2147483647, %v340
    %vm366 = vcmp.eq.f32.partialorder %v365, 8.507059e+37
    %v367 = vand.u32 %v340, 2147483648
    %v368 = vor.u32 1.1754944e-38, %v367
    %v369 = vsel %vm366, %v368, %v364
    %v370 = vmul.f32 1.0, %v369
    %v371 = vtanh.pop %v331
    %v372 = vtanh.pop %v332
    %v375 = vrot.slane %v284, 7
    %v376 = vrot.slane %v285, 7
    %v379 = vmul.f32 %v355, %v375
    %v380 = vmul.f32 %v370, %v376
    %383 = vrot.lane.b32.xlu0 %v371, 64
    %v384 = vpop.permute.xlu0 %383
    %385 = vrot.lane.b32.xlu0 %v372, 64
    %v386 = vpop.permute.xlu0 %385
    %v389 = vmul.f32 %v355, %v384
    %v390 = vmul.f32 %v370, %v386
    %393 = vrot.lane.b32.xlu0 %v389, 32
    %v394 = vpop.permute.xlu0 %393
    %395 = vrot.lane.b32.xlu0 %v390, 32
    %v396 = vpop.permute.xlu0 %395
    %v399 = vadd.f32 %v379, %v394
    %v400 = vadd.f32 %v380, %v396
    %v401 = vtanh.pop %v399
    %v402 = vtanh.pop %v400
    %405 = vrot.lane.b32.xlu0 %v401, 64
    %v406 = vpop.permute.xlu0 %405
    %407 = vrot.lane.b32.xlu0 %v402, 64
    %v408 = vpop.permute.xlu0 %407
    %v411 = vmul.f32 %v355, %v406
    %v412 = vmul.f32 %v370, %v408
    %v415 = vrot.slane %v411, 1
    %v416 = vsel %vm301, %v412, %v415
    %417 = vrot.lane.b32.xlu0 %v416, 32
    %v418 = vpop.permute.xlu0 %417
    %v419 = vsel %vm186, %v418, 0
    %421 = vmatpush.msra.mxu0 0.0
    %422 = vmatpush.msra.mxu0 0.0
    %423 = vmatpush.msra.mxu0 0.0
    %424 = vmatpush.msra.mxu0 0.0
    %425 = vmatpush.msra.mxu0 0.0
    %426 = vmatpush.msra.mxu0 0.0
    %427 = vmatpush.msra.mxu0 0.0
    %428 = vmatpush.msra.mxu0 0.0
    %429 = vmatpush.msra.mxu0 0.0
    %430 = vmatpush.msra.mxu0 0.0
    %431 = vmatpush.msra.mxu0 0.0
    %432 = vmatpush.msra.mxu0 0.0
    %433 = vmatpush.msra.mxu0 %v149
    %434 = vmatpush.msra.mxu0 %v148
    %435 = vmatpush.msra.mxu0 %v147
    %436 = vmatpush.msra.mxu0 %v146
    %437 = vmatmul.f32.gmra.mxu0 %v419
    %v438 = vpop.f32.mrf.mxu0
    %v439 = vadd.f32 0.0, %v438
    %440 = vdwg.mxu0
    %v442 = vrot.slane %v439, 6
    %v443 = vrot.slane %v439, 7
    %v446 = vadd.f32 %v179, %v442
    %v447 = vadd.f32 %v182, %v443
    %v448 = vxor.u32 %v446, 2147483648
    %v449 = vxor.u32 %v447, 2147483648
    %v450 = vmul.f32 %v448, 1.442695
    %v451 = vpow.pop %v450
    %v452 = vmul.f32 %v449, 1.442695
    %v453 = vpow.pop %v452
    %v454 = vadd.f32 %v451, 1.0
    %v455 = vadd.f32 %v453, 1.0
    %v456 = vrcp.pop %v454
    %v457 = vmul.f32 %v454, %v456
    %v458 = vsub.f32 1.0, %v457
    %v459 = vmul.f32 %v456, %v458
    %v460 = vadd.f32 %v456, %v459
    %vm461 = vweird.f32 %v454
    %vm462 = vweird.f32 %v456
    %vm463 = vmor %vm461, %vm462
    %v464 = vsel %vm463, %v456, %v460
    %v465 = vand.u32 2147483647, %v454
    %vm466 = vcmp.eq.f32.partialorder %v465, 8.507059e+37
    %v467 = vand.u32 %v454, 2147483648
    %v468 = vor.u32 1.1754944e-38, %v467
    %v469 = vsel %vm466, %v468, %v464
    %v470 = vmul.f32 1.0, %v469
    %v471 = vrcp.pop %v455
    %v472 = vmul.f32 %v455, %v471
    %v473 = vsub.f32 1.0, %v472
    %v474 = vmul.f32 %v471, %v473
    %v475 = vadd.f32 %v471, %v474
    %vm476 = vweird.f32 %v455
    %vm477 = vweird.f32 %v471
    %vm478 = vmor %vm476, %vm477
    %v479 = vsel %vm478, %v471, %v475
    %v480 = vand.u32 2147483647, %v455
    %vm481 = vcmp.eq.f32.partialorder %v480, 8.507059e+37
    %v482 = vand.u32 %v455, 2147483648
    %v483 = vor.u32 1.1754944e-38, %v482
    %v484 = vsel %vm481, %v483, %v479
    %v485 = vmul.f32 1.0, %v484
    %v486 = vtanh.pop %v446
    %v487 = vtanh.pop %v447
    %v490 = vrot.slane %v399, 7
    %v491 = vrot.slane %v400, 7
    %v494 = vmul.f32 %v470, %v490
    %v495 = vmul.f32 %v485, %v491
    %498 = vrot.lane.b32.xlu0 %v486, 64
    %v499 = vpop.permute.xlu0 %498
    %500 = vrot.lane.b32.xlu0 %v487, 64
    %v501 = vpop.permute.xlu0 %500
    %v504 = vmul.f32 %v470, %v499
    %v505 = vmul.f32 %v485, %v501
    %508 = vrot.lane.b32.xlu0 %v504, 32
    %v509 = vpop.permute.xlu0 %508
    %510 = vrot.lane.b32.xlu0 %v505, 32
    %v511 = vpop.permute.xlu0 %510
    %v514 = vadd.f32 %v494, %v509
    %v515 = vadd.f32 %v495, %v511
    %v516 = vtanh.pop %v514
    %v517 = vtanh.pop %v515
    %520 = vrot.lane.b32.xlu0 %v516, 64
    %v521 = vpop.permute.xlu0 %520
    %522 = vrot.lane.b32.xlu0 %v517, 64
    %v523 = vpop.permute.xlu0 %522
    %v526 = vmul.f32 %v470, %v521
    %v527 = vmul.f32 %v485, %v523
    %v530 = vrot.slane %v526, 2
    %v531 = vrot.slane %v527, 1
    %v532 = vsel %vm301, %v531, %v530
    %533 = vrot.lane.b32.xlu0 %v532, 32
    %v534 = vpop.permute.xlu0 %533
    %v535 = vsel %vm186, %v534, 0
    %537 = vmatpush.msra.mxu0 0.0
    %538 = vmatpush.msra.mxu0 0.0
    %539 = vmatpush.msra.mxu0 0.0
    %540 = vmatpush.msra.mxu0 0.0
    %541 = vmatpush.msra.mxu0 0.0
    %542 = vmatpush.msra.mxu0 0.0
    %543 = vmatpush.msra.mxu0 0.0
    %544 = vmatpush.msra.mxu0 0.0
    %545 = vmatpush.msra.mxu0 0.0
    %546 = vmatpush.msra.mxu0 0.0
    %547 = vmatpush.msra.mxu0 0.0
    %548 = vmatpush.msra.mxu0 0.0
    %549 = vmatpush.msra.mxu0 %v149
    %550 = vmatpush.msra.mxu0 %v148
    %551 = vmatpush.msra.mxu0 %v147
    %552 = vmatpush.msra.mxu0 %v146
    %553 = vmatmul.f32.gmra.mxu0 %v535
    %v554 = vpop.f32.mrf.mxu0
    %v555 = vadd.f32 0.0, %v554
    %556 = vdwg.mxu0
    %v558 = vrot.slane %v555, 5
    %v559 = vrot.slane %v555, 6
    %v562 = vadd.f32 %v179, %v558
    %v563 = vadd.f32 %v182, %v559
    %v564 = vxor.u32 %v562, 2147483648
    %v565 = vxor.u32 %v563, 2147483648
    %v566 = vmul.f32 %v564, 1.442695
    %v567 = vpow.pop %v566
    %v568 = vmul.f32 %v565, 1.442695
    %v569 = vpow.pop %v568
    %v570 = vadd.f32 %v567, 1.0
    %v571 = vadd.f32 %v569, 1.0
    %v572 = vrcp.pop %v570
    %v573 = vmul.f32 %v570, %v572
    %v574 = vsub.f32 1.0, %v573
    %v575 = vmul.f32 %v572, %v574
    %v576 = vadd.f32 %v572, %v575
    %vm577 = vweird.f32 %v570
    %vm578 = vweird.f32 %v572
    %vm579 = vmor %vm577, %vm578
    %v580 = vsel %vm579, %v572, %v576
    %v581 = vand.u32 2147483647, %v570
    %vm582 = vcmp.eq.f32.partialorder %v581, 8.507059e+37
    %v583 = vand.u32 %v570, 2147483648
    %v584 = vor.u32 1.1754944e-38, %v583
    %v585 = vsel %vm582, %v584, %v580
    %v586 = vmul.f32 1.0, %v585
    %v587 = vrcp.pop %v571
    %v588 = vmul.f32 %v571, %v587
    %v589 = vsub.f32 1.0, %v588
    %v590 = vmul.f32 %v587, %v589
    %v591 = vadd.f32 %v587, %v590
    %vm592 = vweird.f32 %v571
    %vm593 = vweird.f32 %v587
    %vm594 = vmor %vm592, %vm593
    %v595 = vsel %vm594, %v587, %v591
    %v596 = vand.u32 2147483647, %v571
    %vm597 = vcmp.eq.f32.partialorder %v596, 8.507059e+37
    %v598 = vand.u32 %v571, 2147483648
    %v599 = vor.u32 1.1754944e-38, %v598
    %v600 = vsel %vm597, %v599, %v595
    %v601 = vmul.f32 1.0, %v600
    %v602 = vtanh.pop %v562
    %v603 = vtanh.pop %v563
    %v606 = vrot.slane %v514, 7
    %v607 = vrot.slane %v515, 7
    %v610 = vmul.f32 %v586, %v606
    %v611 = vmul.f32 %v601, %v607
    %614 = vrot.lane.b32.xlu0 %v602, 64
    %v615 = vpop.permute.xlu0 %614
    %616 = vrot.lane.b32.xlu0 %v603, 64
    %v617 = vpop.permute.xlu0 %616
    %v620 = vmul.f32 %v586, %v615
    %v621 = vmul.f32 %v601, %v617
    %624 = vrot.lane.b32.xlu0 %v620, 32
    %v625 = vpop.permute.xlu0 %624
    %626 = vrot.lane.b32.xlu0 %v621, 32
    %v627 = vpop.permute.xlu0 %626
    %v630 = vadd.f32 %v610, %v625
    %v631 = vadd.f32 %v611, %v627
    %v632 = vtanh.pop %v630
    %v633 = vtanh.pop %v631
    %636 = vrot.lane.b32.xlu0 %v632, 64
    %v637 = vpop.permute.xlu0 %636
    %638 = vrot.lane.b32.xlu0 %v633, 64
    %v639 = vpop.permute.xlu0 %638
    %v642 = vmul.f32 %v586, %v637
    %v643 = vmul.f32 %v601, %v639
    %v646 = vrot.slane %v642, 3
    %v647 = vrot.slane %v643, 2
    %v648 = vsel %vm301, %v647, %v646
    %649 = vrot.lane.b32.xlu0 %v648, 32
    %v650 = vpop.permute.xlu0 %649
    %v651 = vsel %vm186, %v650, 0
    %653 = vmatpush.msra.mxu0 0.0
    %654 = vmatpush.msra.mxu0 0.0
    %655 = vmatpush.msra.mxu0 0.0
    %656 = vmatpush.msra.mxu0 0.0
    %657 = vmatpush.msra.mxu0 0.0
    %658 = vmatpush.msra.mxu0 0.0
    %659 = vmatpush.msra.mxu0 0.0
    %660 = vmatpush.msra.mxu0 0.0
    %661 = vmatpush.msra.mxu0 0.0
    %662 = vmatpush.msra.mxu0 0.0
    %663 = vmatpush.msra.mxu0 0.0
    %664 = vmatpush.msra.mxu0 0.0
    %665 = vmatpush.msra.mxu0 %v149
    %666 = vmatpush.msra.mxu0 %v148
    %667 = vmatpush.msra.mxu0 %v147
    %668 = vmatpush.msra.mxu0 %v146
    %669 = vmatmul.f32.gmra.mxu0 %v651
    %v670 = vpop.f32.mrf.mxu0
    %v671 = vadd.f32 0.0, %v670
    %672 = vdwg.mxu0
    %v674 = vrot.slane %v671, 4
    %v675 = vrot.slane %v671, 5
    %v678 = vadd.f32 %v179, %v674
    %v679 = vadd.f32 %v182, %v675
    %v680 = vxor.u32 %v678, 2147483648
    %v681 = vxor.u32 %v679, 2147483648
    %v682 = vmul.f32 %v680, 1.442695
    %v683 = vpow.pop %v682
    %v684 = vmul.f32 %v681, 1.442695
    %v685 = vpow.pop %v684
    %v686 = vadd.f32 %v683, 1.0
    %v687 = vadd.f32 %v685, 1.0
    %v688 = vrcp.pop %v686
    %v689 = vmul.f32 %v686, %v688
    %v690 = vsub.f32 1.0, %v689
    %v691 = vmul.f32 %v688, %v690
    %v692 = vadd.f32 %v688, %v691
    %vm693 = vweird.f32 %v686
    %vm694 = vweird.f32 %v688
    %vm695 = vmor %vm693, %vm694
    %v696 = vsel %vm695, %v688, %v692
    %v697 = vand.u32 2147483647, %v686
    %vm698 = vcmp.eq.f32.partialorder %v697, 8.507059e+37
    %v699 = vand.u32 %v686, 2147483648
    %v700 = vor.u32 1.1754944e-38, %v699
    %v701 = vsel %vm698, %v700, %v696
    %v702 = vmul.f32 1.0, %v701
    %v703 = vrcp.pop %v687
    %v704 = vmul.f32 %v687, %v703
    %v705 = vsub.f32 1.0, %v704
    %v706 = vmul.f32 %v703, %v705
    %v707 = vadd.f32 %v703, %v706
    %vm708 = vweird.f32 %v687
    %vm709 = vweird.f32 %v703
    %vm710 = vmor %vm708, %vm709
    %v711 = vsel %vm710, %v703, %v707
    %v712 = vand.u32 2147483647, %v687
    %vm713 = vcmp.eq.f32.partialorder %v712, 8.507059e+37
    %v714 = vand.u32 %v687, 2147483648
    %v715 = vor.u32 1.1754944e-38, %v714
    %v716 = vsel %vm713, %v715, %v711
    %v717 = vmul.f32 1.0, %v716
    %v718 = vtanh.pop %v678
    %v719 = vtanh.pop %v679
    %v722 = vrot.slane %v630, 7
    %v723 = vrot.slane %v631, 7
    %v726 = vmul.f32 %v702, %v722
    %v727 = vmul.f32 %v717, %v723
    %730 = vrot.lane.b32.xlu0 %v718, 64
    %v731 = vpop.permute.xlu0 %730
    %732 = vrot.lane.b32.xlu0 %v719, 64
    %v733 = vpop.permute.xlu0 %732
    %v736 = vmul.f32 %v702, %v731
    %v737 = vmul.f32 %v717, %v733
    %740 = vrot.lane.b32.xlu0 %v736, 32
    %v741 = vpop.permute.xlu0 %740
    %742 = vrot.lane.b32.xlu0 %v737, 32
    %v743 = vpop.permute.xlu0 %742
    %v746 = vadd.f32 %v726, %v741
    %v747 = vadd.f32 %v727, %v743
    %v748 = vtanh.pop %v746
    %v749 = vtanh.pop %v747
    %752 = vrot.lane.b32.xlu0 %v748, 64
    %v753 = vpop.permute.xlu0 %752
    %754 = vrot.lane.b32.xlu0 %v749, 64
    %v755 = vpop.permute.xlu0 %754
    %v758 = vmul.f32 %v702, %v753
    %v759 = vmul.f32 %v717, %v755
    %v762 = vrot.slane %v758, 4
    %v763 = vrot.slane %v759, 3
    %v764 = vsel %vm301, %v763, %v762
    %765 = vrot.lane.b32.xlu0 %v764, 32
    %v766 = vpop.permute.xlu0 %765
    %v767 = vsel %vm186, %v766, 0
    %769 = vmatpush.msra.mxu0 0.0
    %770 = vmatpush.msra.mxu0 0.0
    %771 = vmatpush.msra.mxu0 0.0
    %772 = vmatpush.msra.mxu0 0.0
    %773 = vmatpush.msra.mxu0 0.0
    %774 = vmatpush.msra.mxu0 0.0
    %775 = vmatpush.msra.mxu0 0.0
    %776 = vmatpush.msra.mxu0 0.0
    %777 = vmatpush.msra.mxu0 0.0
    %778 = vmatpush.msra.mxu0 0.0
    %779 = vmatpush.msra.mxu0 0.0
    %780 = vmatpush.msra.mxu0 0.0
    %781 = vmatpush.msra.mxu0 %v149
    %782 = vmatpush.msra.mxu0 %v148
    %783 = vmatpush.msra.mxu0 %v147
    %784 = vmatpush.msra.mxu0 %v146
    %785 = vmatmul.f32.gmra.mxu0 %v767
    %v786 = vpop.f32.mrf.mxu0
    %v787 = vadd.f32 0.0, %v786
    %788 = vdwg.mxu0
    %v790 = vrot.slane %v787, 3
    %v791 = vrot.slane %v787, 4
    %v794 = vadd.f32 %v179, %v790
    %v795 = vadd.f32 %v182, %v791
    %v796 = vxor.u32 %v794, 2147483648
    %v797 = vxor.u32 %v795, 2147483648
    %v798 = vmul.f32 %v796, 1.442695
    %v799 = vpow.pop %v798
    %v800 = vmul.f32 %v797, 1.442695
    %v801 = vpow.pop %v800
    %v802 = vadd.f32 %v799, 1.0
    %v803 = vadd.f32 %v801, 1.0
    %v804 = vrcp.pop %v802
    %v805 = vmul.f32 %v802, %v804
    %v806 = vsub.f32 1.0, %v805
    %v807 = vmul.f32 %v804, %v806
    %v808 = vadd.f32 %v804, %v807
    %vm809 = vweird.f32 %v802
    %vm810 = vweird.f32 %v804
    %vm811 = vmor %vm809, %vm810
    %v812 = vsel %vm811, %v804, %v808
    %v813 = vand.u32 2147483647, %v802
    %vm814 = vcmp.eq.f32.partialorder %v813, 8.507059e+37
    %v815 = vand.u32 %v802, 2147483648
    %v816 = vor.u32 1.1754944e-38, %v815
    %v817 = vsel %vm814, %v816, %v812
    %v818 = vmul.f32 1.0, %v817
    %v819 = vrcp.pop %v803
    %v820 = vmul.f32 %v803, %v819
    %v821 = vsub.f32 1.0, %v820
    %v822 = vmul.f32 %v819, %v821
    %v823 = vadd.f32 %v819, %v822
    %vm824 = vweird.f32 %v803
    %vm825 = vweird.f32 %v819
    %vm826 = vmor %vm824, %vm825
    %v827 = vsel %vm826, %v819, %v823
    %v828 = vand.u32 2147483647, %v803
    %vm829 = vcmp.eq.f32.partialorder %v828, 8.507059e+37
    %v830 = vand.u32 %v803, 2147483648
    %v831 = vor.u32 1.1754944e-38, %v830
    %v832 = vsel %vm829, %v831, %v827
    %v833 = vmul.f32 1.0, %v832
    %v834 = vtanh.pop %v794
    %v835 = vtanh.pop %v795
    %v838 = vrot.slane %v746, 7
    %v839 = vrot.slane %v747, 7
    %v842 = vmul.f32 %v818, %v838
    %v843 = vmul.f32 %v833, %v839
    %846 = vrot.lane.b32.xlu0 %v834, 64
    %v847 = vpop.permute.xlu0 %846
    %848 = vrot.lane.b32.xlu0 %v835, 64
    %v849 = vpop.permute.xlu0 %848
    %v852 = vmul.f32 %v818, %v847
    %v853 = vmul.f32 %v833, %v849
    %856 = vrot.lane.b32.xlu0 %v852, 32
    %v857 = vpop.permute.xlu0 %856
    %858 = vrot.lane.b32.xlu0 %v853, 32
    %v859 = vpop.permute.xlu0 %858
    %v862 = vadd.f32 %v842, %v857
    %v863 = vadd.f32 %v843, %v859
    %v864 = vtanh.pop %v862
    %v865 = vtanh.pop %v863
    %868 = vrot.lane.b32.xlu0 %v864, 64
    %v869 = vpop.permute.xlu0 %868
    %870 = vrot.lane.b32.xlu0 %v865, 64
    %v871 = vpop.permute.xlu0 %870
    %v874 = vmul.f32 %v818, %v869
    %v875 = vmul.f32 %v833, %v871
    %v878 = vrot.slane %v874, 5
    %v879 = vrot.slane %v875, 4
    %v880 = vsel %vm301, %v879, %v878
    %881 = vrot.lane.b32.xlu0 %v880, 32
    %v882 = vpop.permute.xlu0 %881
    %v883 = vsel %vm186, %v882, 0
    %885 = vmatpush.msra.mxu0 0.0
    %886 = vmatpush.msra.mxu0 0.0
    %887 = vmatpush.msra.mxu0 0.0
    %888 = vmatpush.msra.mxu0 0.0
    %889 = vmatpush.msra.mxu0 0.0
    %890 = vmatpush.msra.mxu0 0.0
    %891 = vmatpush.msra.mxu0 0.0
    %892 = vmatpush.msra.mxu0 0.0
    %893 = vmatpush.msra.mxu0 0.0
    %894 = vmatpush.msra.mxu0 0.0
    %895 = vmatpush.msra.mxu0 0.0
    %896 = vmatpush.msra.mxu0 0.0
    %897 = vmatpush.msra.mxu0 %v149
    %898 = vmatpush.msra.mxu0 %v148
    %899 = vmatpush.msra.mxu0 %v147
    %900 = vmatpush.msra.mxu0 %v146
    %901 = vmatmul.f32.gmra.mxu0 %v883
    %v902 = vpop.f32.mrf.mxu0
    %v903 = vadd.f32 0.0, %v902
    %904 = vdwg.mxu0
    %v906 = vrot.slane %v903, 2
    %v907 = vrot.slane %v903, 3
    %v910 = vadd.f32 %v179, %v906
    %v911 = vadd.f32 %v182, %v907
    %v912 = vxor.u32 %v910, 2147483648
    %v913 = vxor.u32 %v911, 2147483648
    %v914 = vmul.f32 %v912, 1.442695
    %v915 = vpow.pop %v914
    %v916 = vmul.f32 %v913, 1.442695
    %v917 = vpow.pop %v916
    %v918 = vadd.f32 %v915, 1.0
    %v919 = vadd.f32 %v917, 1.0
    %v920 = vrcp.pop %v918
    %v921 = vmul.f32 %v918, %v920
    %v922 = vsub.f32 1.0, %v921
    %v923 = vmul.f32 %v920, %v922
    %v924 = vadd.f32 %v920, %v923
    %vm925 = vweird.f32 %v918
    %vm926 = vweird.f32 %v920
    %vm927 = vmor %vm925, %vm926
    %v928 = vsel %vm927, %v920, %v924
    %v929 = vand.u32 2147483647, %v918
    %vm930 = vcmp.eq.f32.partialorder %v929, 8.507059e+37
    %v931 = vand.u32 %v918, 2147483648
    %v932 = vor.u32 1.1754944e-38, %v931
    %v933 = vsel %vm930, %v932, %v928
    %v934 = vmul.f32 1.0, %v933
    %v935 = vrcp.pop %v919
    %v936 = vmul.f32 %v919, %v935
    %v937 = vsub.f32 1.0, %v936
    %v938 = vmul.f32 %v935, %v937
    %v939 = vadd.f32 %v935, %v938
    %vm940 = vweird.f32 %v919
    %vm941 = vweird.f32 %v935
    %vm942 = vmor %vm940, %vm941
    %v943 = vsel %vm942, %v935, %v939
    %v944 = vand.u32 2147483647, %v919
    %vm945 = vcmp.eq.f32.partialorder %v944, 8.507059e+37
    %v946 = vand.u32 %v919, 2147483648
    %v947 = vor.u32 1.1754944e-38, %v946
    %v948 = vsel %vm945, %v947, %v943
    %v949 = vmul.f32 1.0, %v948
    %v950 = vtanh.pop %v910
    %v951 = vtanh.pop %v911
    %v954 = vrot.slane %v862, 7
    %v955 = vrot.slane %v863, 7
    %v958 = vmul.f32 %v934, %v954
    %v959 = vmul.f32 %v949, %v955
    %962 = vrot.lane.b32.xlu0 %v950, 64
    %v963 = vpop.permute.xlu0 %962
    %964 = vrot.lane.b32.xlu0 %v951, 64
    %v965 = vpop.permute.xlu0 %964
    %v968 = vmul.f32 %v934, %v963
    %v969 = vmul.f32 %v949, %v965
    %972 = vrot.lane.b32.xlu0 %v968, 32
    %v973 = vpop.permute.xlu0 %972
    %974 = vrot.lane.b32.xlu0 %v969, 32
    %v975 = vpop.permute.xlu0 %974
    %v978 = vadd.f32 %v958, %v973
    %v979 = vadd.f32 %v959, %v975
    %v980 = vtanh.pop %v978
    %v981 = vtanh.pop %v979
    %984 = vrot.lane.b32.xlu0 %v980, 64
    %v985 = vpop.permute.xlu0 %984
    %986 = vrot.lane.b32.xlu0 %v981, 64
    %v987 = vpop.permute.xlu0 %986
    %v990 = vmul.f32 %v934, %v985
    %v991 = vmul.f32 %v949, %v987
    %v994 = vrot.slane %v990, 6
    %v995 = vrot.slane %v991, 5
    %v996 = vsel %vm301, %v995, %v994
    %997 = vrot.lane.b32.xlu0 %v996, 32
    %v998 = vpop.permute.xlu0 %997
    %v999 = vsel %vm186, %v998, 0
    %1001 = vmatpush.msra.mxu0 0.0
    %1002 = vmatpush.msra.mxu0 0.0
    %1003 = vmatpush.msra.mxu0 0.0
    %1004 = vmatpush.msra.mxu0 0.0
    %1005 = vmatpush.msra.mxu0 0.0
    %1006 = vmatpush.msra.mxu0 0.0
    %1007 = vmatpush.msra.mxu0 0.0
    %1008 = vmatpush.msra.mxu0 0.0
    %1009 = vmatpush.msra.mxu0 0.0
    %1010 = vmatpush.msra.mxu0 0.0
    %1011 = vmatpush.msra.mxu0 0.0
    %1012 = vmatpush.msra.mxu0 0.0
    %1013 = vmatpush.msra.mxu0 %v149
    %1014 = vmatpush.msra.mxu0 %v148
    %1015 = vmatpush.msra.mxu0 %v147
    %1016 = vmatpush.msra.mxu0 %v146
    %1017 = vmatmul.f32.gmra.mxu0 %v999
    %v1018 = vpop.f32.mrf.mxu0
    %v1019 = vadd.f32 0.0, %v1018
    %1020 = vdwg.mxu0
    %v1022 = vrot.slane %v1019, 1
    %v1023 = vrot.slane %v1019, 2
    %v1026 = vadd.f32 %v179, %v1022
    %v1027 = vadd.f32 %v182, %v1023
    %v1028 = vxor.u32 %v1026, 2147483648
    %v1029 = vxor.u32 %v1027, 2147483648
    %v1030 = vmul.f32 %v1028, 1.442695
    %v1031 = vpow.pop %v1030
    %v1032 = vmul.f32 %v1029, 1.442695
    %v1033 = vpow.pop %v1032
    %v1034 = vadd.f32 %v1031, 1.0
    %v1035 = vadd.f32 %v1033, 1.0
    %v1036 = vrcp.pop %v1034
    %v1037 = vmul.f32 %v1034, %v1036
    %v1038 = vsub.f32 1.0, %v1037
    %v1039 = vmul.f32 %v1036, %v1038
    %v1040 = vadd.f32 %v1036, %v1039
    %vm1041 = vweird.f32 %v1034
    %vm1042 = vweird.f32 %v1036
    %vm1043 = vmor %vm1041, %vm1042
    %v1044 = vsel %vm1043, %v1036, %v1040
    %v1045 = vand.u32 2147483647, %v1034
    %vm1046 = vcmp.eq.f32.partialorder %v1045, 8.507059e+37
    %v1047 = vand.u32 %v1034, 2147483648
    %v1048 = vor.u32 1.1754944e-38, %v1047
    %v1049 = vsel %vm1046, %v1048, %v1044
    %v1050 = vmul.f32 1.0, %v1049
    %v1051 = vrcp.pop %v1035
    %v1052 = vmul.f32 %v1035, %v1051
    %v1053 = vsub.f32 1.0, %v1052
    %v1054 = vmul.f32 %v1051, %v1053
    %v1055 = vadd.f32 %v1051, %v1054
    %vm1056 = vweird.f32 %v1035
    %vm1057 = vweird.f32 %v1051
    %vm1058 = vmor %vm1056, %vm1057
    %v1059 = vsel %vm1058, %v1051, %v1055
    %v1060 = vand.u32 2147483647, %v1035
    %vm1061 = vcmp.eq.f32.partialorder %v1060, 8.507059e+37
    %v1062 = vand.u32 %v1035, 2147483648
    %v1063 = vor.u32 1.1754944e-38, %v1062
    %v1064 = vsel %vm1061, %v1063, %v1059
    %v1065 = vmul.f32 1.0, %v1064
    %v1066 = vtanh.pop %v1026
    %v1067 = vtanh.pop %v1027
    %v1070 = vrot.slane %v978, 7
    %v1071 = vrot.slane %v979, 7
    %v1074 = vmul.f32 %v1050, %v1070
    %v1075 = vmul.f32 %v1065, %v1071
    %1078 = vrot.lane.b32.xlu0 %v1066, 64
    %v1079 = vpop.permute.xlu0 %1078
    %1080 = vrot.lane.b32.xlu0 %v1067, 64
    %v1081 = vpop.permute.xlu0 %1080
    %v1084 = vmul.f32 %v1050, %v1079
    %v1085 = vmul.f32 %v1065, %v1081
    %1088 = vrot.lane.b32.xlu0 %v1084, 32
    %v1089 = vpop.permute.xlu0 %1088
    %1090 = vrot.lane.b32.xlu0 %v1085, 32
    %v1091 = vpop.permute.xlu0 %1090
    %v1094 = vadd.f32 %v1074, %v1089
    %v1095 = vadd.f32 %v1075, %v1091
    %v1096 = vtanh.pop %v1094
    %v1097 = vtanh.pop %v1095
    %1100 = vrot.lane.b32.xlu0 %v1096, 64
    %v1101 = vpop.permute.xlu0 %1100
    %1102 = vrot.lane.b32.xlu0 %v1097, 64
    %v1103 = vpop.permute.xlu0 %1102
    %v1106 = vmul.f32 %v1050, %v1101
    %v1107 = vmul.f32 %v1065, %v1103
    %vm1108 = vcmask 1040384
    %v1109 = vsel %vm1108, %v296, %v411
    %v1110 = vsel %vm1108, %v297, %v412
    %vm1111 = vcmask 1041408
    %v1112 = vsel %vm1111, %v1109, %v526
    %v1113 = vsel %vm1111, %v1110, %v527
    %vm1114 = vcmask 1042432
    %v1115 = vsel %vm1114, %v1112, %v642
    %v1116 = vsel %vm1114, %v1113, %v643
    %vm1117 = vcmask 1043456
    %v1118 = vsel %vm1117, %v1115, %v758
    %v1119 = vsel %vm1117, %v1116, %v759
    %vm1120 = vcmask 1044480
    %v1121 = vsel %vm1120, %v1118, %v874
    %v1122 = vsel %vm1120, %v1119, %v875
    %vm1123 = vcmask 1045504
    %v1124 = vsel %vm1123, %v1121, %v990
    %v1125 = vsel %vm1123, %v1122, %v991
    %vm1126 = vcmask 1046528
    %v1127 = vsel %vm1126, %v1124, %v1106
    %v1128 = vsel %vm1126, %v1125, %v1107
    %v1129 = vld [vmem:[#allocation11] sm:$0xff]
    %v1130 = vld [vmem:[#allocation11 + $0x8] sm:$0xff]
    %v1131 = vld [vmem:[#allocation11 + $0x10] sm:$0xff]
    %v1132 = vld [vmem:[#allocation11 + $0x18] sm:$0xff]
    %v1133 = vld [vmem:[#allocation13] sm:$0xff]
    %v1134 = vld [vmem:[#allocation13 + $0x8] sm:$0xff]
    %v1135 = vld [vmem:[#allocation13 + $0x10] sm:$0xff]
    %v1136 = vld [vmem:[#allocation13 + $0x18] sm:$0xff]
    %v1137 = vld [vmem:[%s8] sm:$0x1]
    %v1139 = vperm.slane %v1137, 0
    %1143 = vrot.lane.b32.xlu0 %v1127, 32
    %v1144 = vpop.permute.xlu0 %1143
    %1145 = vrot.lane.b32.xlu0 %v1128, 32
    %v1146 = vpop.permute.xlu0 %1145
    %v1147 = vsel %vm186, %v1144, 0
    %v1149 = vsel %vm186, %v1146, 0
    %1151 = vmatpush.msra.mxu0 0.0
    %1152 = vmatpush.msra.mxu0 0.0
    %1153 = vmatpush.msra.mxu0 0.0
    %1154 = vmatpush.msra.mxu0 0.0
    %1155 = vmatpush.msra.mxu0 0.0
    %1156 = vmatpush.msra.mxu0 0.0
    %1157 = vmatpush.msra.mxu0 0.0
    %1158 = vmatpush.msra.mxu0 0.0
    %1159 = vmatpush.msra.mxu0 0.0
    %1160 = vmatpush.msra.mxu0 0.0
    %1161 = vmatpush.msra.mxu0 0.0
    %1162 = vmatpush.msra.mxu0 0.0
    %1163 = vmatpush.msra.mxu0 %v1132
    %1164 = vmatpush.msra.mxu0 %v1131
    %1165 = vmatpush.msra.mxu0 %v1130
    %1166 = vmatpush.msra.mxu0 %v1129
    %1167 = vmatmul.f32.gmra.mxu0 %v1147
    %v1168 = vpop.f32.mrf.mxu0
    %v1169 = vadd.f32 %v1139, %v1168
    %1170 = vmatmul.f32.gmra.mxu0 %v1149
    %v1171 = vpop.f32.mrf.mxu0
    %v1172 = vadd.f32 %v1139, %v1171
    %1173 = vdwg.mxu0
    %s1174 = scalar_lea.vmem [#allocation5], 2
    %v1175 = vld [vmem:[%s1174] sm:$0x3]
    %s1176 = scalar_lea.vmem [#allocation7], 2
    %v1177 = vld [vmem:[%s1176] sm:$0x3]
    %v1179 = vsel %vm186, %v1175, 0
    %1181 = vmatpush.msra.mxu0 0.0
    %1182 = vmatpush.msra.mxu0 0.0
    %1183 = vmatpush.msra.mxu0 0.0
    %1184 = vmatpush.msra.mxu0 0.0
    %1185 = vmatpush.msra.mxu0 0.0
    %1186 = vmatpush.msra.mxu0 0.0
    %1187 = vmatpush.msra.mxu0 0.0
    %1188 = vmatpush.msra.mxu0 0.0
    %1189 = vmatpush.msra.mxu0 0.0
    %1190 = vmatpush.msra.mxu0 0.0
    %1191 = vmatpush.msra.mxu0 0.0
    %1192 = vmatpush.msra.mxu0 0.0
    %1193 = vmatpush.msra.mxu0 %v1136
    %1194 = vmatpush.msra.mxu0 %v1135
    %1195 = vmatpush.msra.mxu0 %v1134
    %1196 = vmatpush.msra.mxu0 %v1133
    %1197 = vmatmul.f32.gmra.mxu0 %v1179
    %v1198 = vpop.f32.mrf.mxu0
    %v1199 = vadd.f32 0.0, %v1198
    %1200 = vdwg.mxu0
    %v1202 = vrot.slane %v1199, 1
    %v1205 = vadd.f32 %v1169, %v1199
    %v1206 = vadd.f32 %v1172, %v1202
    %v1207 = vxor.u32 %v1205, 2147483648
    %v1208 = vxor.u32 %v1206, 2147483648
    %v1209 = vmul.f32 %v1207, 1.442695
    %v1210 = vpow.pop %v1209
    %v1211 = vmul.f32 %v1208, 1.442695
    %v1212 = vpow.pop %v1211
    %v1213 = vadd.f32 %v1210, 1.0
    %v1214 = vadd.f32 %v1212, 1.0
    %v1215 = vrcp.pop %v1213
    %v1216 = vmul.f32 %v1213, %v1215
    %v1217 = vsub.f32 1.0, %v1216
    %v1218 = vmul.f32 %v1215, %v1217
    %v1219 = vadd.f32 %v1215, %v1218
    %vm1220 = vweird.f32 %v1213
    %vm1221 = vweird.f32 %v1215
    %vm1222 = vmor %vm1220, %vm1221
    %v1223 = vsel %vm1222, %v1215, %v1219
    %v1224 = vand.u32 2147483647, %v1213
    %vm1225 = vcmp.eq.f32.partialorder %v1224, 8.507059e+37
    %v1226 = vand.u32 %v1213, 2147483648
    %v1227 = vor.u32 1.1754944e-38, %v1226
    %v1228 = vsel %vm1225, %v1227, %v1223
    %v1229 = vmul.f32 1.0, %v1228
    %v1230 = vrcp.pop %v1214
    %v1231 = vmul.f32 %v1214, %v1230
    %v1232 = vsub.f32 1.0, %v1231
    %v1233 = vmul.f32 %v1230, %v1232
    %v1234 = vadd.f32 %v1230, %v1233
    %vm1235 = vweird.f32 %v1214
    %vm1236 = vweird.f32 %v1230
    %vm1237 = vmor %vm1235, %vm1236
    %v1238 = vsel %vm1237, %v1230, %v1234
    %v1239 = vand.u32 2147483647, %v1214
    %vm1240 = vcmp.eq.f32.partialorder %v1239, 8.507059e+37
    %v1241 = vand.u32 %v1214, 2147483648
    %v1242 = vor.u32 1.1754944e-38, %v1241
    %v1243 = vsel %vm1240, %v1242, %v1238
    %v1244 = vmul.f32 1.0, %v1243
    %v1245 = vtanh.pop %v1205
    %v1246 = vtanh.pop %v1206
    %v1248 = vrot.slane %v1177, 1
    %1249 = vrot.lane.b32.xlu0 %v1177, 32
    %v1250 = vpop.permute.xlu0 %1249
    %1251 = vrot.lane.b32.xlu0 %v1248, 32
    %v1252 = vpop.permute.xlu0 %1251
    %v1255 = vmul.f32 %v1229, %v1250
    %v1256 = vmul.f32 %v1244, %v1252
    %1259 = vrot.lane.b32.xlu0 %v1245, 64
    %v1260 = vpop.permute.xlu0 %1259
    %1261 = vrot.lane.b32.xlu0 %v1246, 64
    %v1262 = vpop.permute.xlu0 %1261
    %v1265 = vmul.f32 %v1229, %v1260
    %v1266 = vmul.f32 %v1244, %v1262
    %1269 = vrot.lane.b32.xlu0 %v1265, 32
    %v1270 = vpop.permute.xlu0 %1269
    %1271 = vrot.lane.b32.xlu0 %v1266, 32
    %v1272 = vpop.permute.xlu0 %1271
    %v1275 = vadd.f32 %v1255, %v1270
    %v1276 = vadd.f32 %v1256, %v1272
    %v1277 = vtanh.pop %v1275
    %v1278 = vtanh.pop %v1276
    %1281 = vrot.lane.b32.xlu0 %v1277, 64
    %v1282 = vpop.permute.xlu0 %1281
    %1283 = vrot.lane.b32.xlu0 %v1278, 64
    %v1284 = vpop.permute.xlu0 %1283
    %v1287 = vmul.f32 %v1229, %v1282
    %v1288 = vmul.f32 %v1244, %v1284
    %v1291 = vrot.slane %v1288, 7
    %v1292 = vsel %vm301, %v1291, %v1287
    %1293 = vrot.lane.b32.xlu0 %v1292, 32
    %v1294 = vpop.permute.xlu0 %1293
    %v1295 = vsel %vm186, %v1294, 0
    %1297 = vmatpush.msra.mxu0 0.0
    %1298 = vmatpush.msra.mxu0 0.0
    %1299 = vmatpush.msra.mxu0 0.0
    %1300 = vmatpush.msra.mxu0 0.0
    %1301 = vmatpush.msra.mxu0 0.0
    %1302 = vmatpush.msra.mxu0 0.0
    %1303 = vmatpush.msra.mxu0 0.0
    %1304 = vmatpush.msra.mxu0 0.0
    %1305 = vmatpush.msra.mxu0 0.0
    %1306 = vmatpush.msra.mxu0 0.0
    %1307 = vmatpush.msra.mxu0 0.0
    %1308 = vmatpush.msra.mxu0 0.0
    %1309 = vmatpush.msra.mxu0 %v1136
    %1310 = vmatpush.msra.mxu0 %v1135
    %1311 = vmatpush.msra.mxu0 %v1134
    %1312 = vmatpush.msra.mxu0 %v1133
    %1313 = vmatmul.f32.gmra.mxu0 %v1295
    %v1314 = vpop.f32.mrf.mxu0
    %v1315 = vadd.f32 0.0, %v1314
    %1316 = vdwg.mxu0
    %v1318 = vrot.slane %v1315, 7
    %v1321 = vadd.f32 %v1169, %v1318
    %v1322 = vadd.f32 %v1172, %v1315
    %v1323 = vxor.u32 %v1321, 2147483648
    %v1324 = vxor.u32 %v1322, 2147483648
    %v1325 = vmul.f32 %v1323, 1.442695
    %v1326 = vpow.pop %v1325
    %v1327 = vmul.f32 %v1324, 1.442695
    %v1328 = vpow.pop %v1327
    %v1329 = vadd.f32 %v1326, 1.0
    %v1330 = vadd.f32 %v1328, 1.0
    %v1331 = vrcp.pop %v1329
    %v1332 = vmul.f32 %v1329, %v1331
    %v1333 = vsub.f32 1.0, %v1332
    %v1334 = vmul.f32 %v1331, %v1333
    %v1335 = vadd.f32 %v1331, %v1334
    %vm1336 = vweird.f32 %v1329
    %vm1337 = vweird.f32 %v1331
    %vm1338 = vmor %vm1336, %vm1337
    %v1339 = vsel %vm1338, %v1331, %v1335
    %v1340 = vand.u32 2147483647, %v1329
    %vm1341 = vcmp.eq.f32.partialorder %v1340, 8.507059e+37
    %v1342 = vand.u32 %v1329, 2147483648
    %v1343 = vor.u32 1.1754944e-38, %v1342
    %v1344 = vsel %vm1341, %v1343, %v1339
    %v1345 = vmul.f32 1.0, %v1344
    %v1346 = vrcp.pop %v1330
    %v1347 = vmul.f32 %v1330, %v1346
    %v1348 = vsub.f32 1.0, %v1347
    %v1349 = vmul.f32 %v1346, %v1348
    %v1350 = vadd.f32 %v1346, %v1349
    %vm1351 = vweird.f32 %v1330
    %vm1352 = vweird.f32 %v1346
    %vm1353 = vmor %vm1351, %vm1352
    %v1354 = vsel %vm1353, %v1346, %v1350
    %v1355 = vand.u32 2147483647, %v1330
    %vm1356 = vcmp.eq.f32.partialorder %v1355, 8.507059e+37
    %v1357 = vand.u32 %v1330, 2147483648
    %v1358 = vor.u32 1.1754944e-38, %v1357
    %v1359 = vsel %vm1356, %v1358, %v1354
    %v1360 = vmul.f32 1.0, %v1359
    %v1361 = vtanh.pop %v1321
    %v1362 = vtanh.pop %v1322
    %v1365 = vrot.slane %v1275, 7
    %v1366 = vrot.slane %v1276, 7
    %v1369 = vmul.f32 %v1345, %v1365
    %v1370 = vmul.f32 %v1360, %v1366
    %1373 = vrot.lane.b32.xlu0 %v1361, 64
    %v1374 = vpop.permute.xlu0 %1373
    %1375 = vrot.lane.b32.xlu0 %v1362, 64
    %v1376 = vpop.permute.xlu0 %1375
    %v1379 = vmul.f32 %v1345, %v1374
    %v1380 = vmul.f32 %v1360, %v1376
    %1383 = vrot.lane.b32.xlu0 %v1379, 32
    %v1384 = vpop.permute.xlu0 %1383
    %1385 = vrot.lane.b32.xlu0 %v1380, 32
    %v1386 = vpop.permute.xlu0 %1385
    %v1389 = vadd.f32 %v1369, %v1384
    %v1390 = vadd.f32 %v1370, %v1386
    %v1391 = vtanh.pop %v1389
    %v1392 = vtanh.pop %v1390
    %1395 = vrot.lane.b32.xlu0 %v1391, 64
    %v1396 = vpop.permute.xlu0 %1395
    %1397 = vrot.lane.b32.xlu0 %v1392, 64
    %v1398 = vpop.permute.xlu0 %1397
    %v1401 = vmul.f32 %v1345, %v1396
    %v1402 = vmul.f32 %v1360, %v1398
    %v1405 = vrot.slane %v1401, 1
    %v1406 = vsel %vm301, %v1402, %v1405
    %1407 = vrot.lane.b32.xlu0 %v1406, 32
    %v1408 = vpop.permute.xlu0 %1407
    %v1409 = vsel %vm186, %v1408, 0
    %1411 = vmatpush.msra.mxu0 0.0
    %1412 = vmatpush.msra.mxu0 0.0
    %1413 = vmatpush.msra.mxu0 0.0
    %1414 = vmatpush.msra.mxu0 0.0
    %1415 = vmatpush.msra.mxu0 0.0
    %1416 = vmatpush.msra.mxu0 0.0
    %1417 = vmatpush.msra.mxu0 0.0
    %1418 = vmatpush.msra.mxu0 0.0
    %1419 = vmatpush.msra.mxu0 0.0
    %1420 = vmatpush.msra.mxu0 0.0
    %1421 = vmatpush.msra.mxu0 0.0
    %1422 = vmatpush.msra.mxu0 0.0
    %1423 = vmatpush.msra.mxu0 %v1136
    %1424 = vmatpush.msra.mxu0 %v1135
    %1425 = vmatpush.msra.mxu0 %v1134
    %1426 = vmatpush.msra.mxu0 %v1133
    %1427 = vmatmul.f32.gmra.mxu0 %v1409
    %v1428 = vpop.f32.mrf.mxu0
    %v1429 = vadd.f32 0.0, %v1428
    %1430 = vdwg.mxu0
    %v1432 = vrot.slane %v1429, 6
    %v1433 = vrot.slane %v1429, 7
    %v1436 = vadd.f32 %v1169, %v1432
    %v1437 = vadd.f32 %v1172, %v1433
    %v1438 = vxor.u32 %v1436, 2147483648
    %v1439 = vxor.u32 %v1437, 2147483648
    %v1440 = vmul.f32 %v1438, 1.442695
    %v1441 = vpow.pop %v1440
    %v1442 = vmul.f32 %v1439, 1.442695
    %v1443 = vpow.pop %v1442
    %v1444 = vadd.f32 %v1441, 1.0
    %v1445 = vadd.f32 %v1443, 1.0
    %v1446 = vrcp.pop %v1444
    %v1447 = vmul.f32 %v1444, %v1446
    %v1448 = vsub.f32 1.0, %v1447
    %v1449 = vmul.f32 %v1446, %v1448
    %v1450 = vadd.f32 %v1446, %v1449
    %vm1451 = vweird.f32 %v1444
    %vm1452 = vweird.f32 %v1446
    %vm1453 = vmor %vm1451, %vm1452
    %v1454 = vsel %vm1453, %v1446, %v1450
    %v1455 = vand.u32 2147483647, %v1444
    %vm1456 = vcmp.eq.f32.partialorder %v1455, 8.507059e+37
    %v1457 = vand.u32 %v1444, 2147483648
    %v1458 = vor.u32 1.1754944e-38, %v1457
    %v1459 = vsel %vm1456, %v1458, %v1454
    %v1460 = vmul.f32 1.0, %v1459
    %v1461 = vrcp.pop %v1445
    %v1462 = vmul.f32 %v1445, %v1461
    %v1463 = vsub.f32 1.0, %v1462
    %v1464 = vmul.f32 %v1461, %v1463
    %v1465 = vadd.f32 %v1461, %v1464
    %vm1466 = vweird.f32 %v1445
    %vm1467 = vweird.f32 %v1461
    %vm1468 = vmor %vm1466, %vm1467
    %v1469 = vsel %vm1468, %v1461, %v1465
    %v1470 = vand.u32 2147483647, %v1445
    %vm1471 = vcmp.eq.f32.partialorder %v1470, 8.507059e+37
    %v1472 = vand.u32 %v1445, 2147483648
    %v1473 = vor.u32 1.1754944e-38, %v1472
    %v1474 = vsel %vm1471, %v1473, %v1469
    %v1475 = vmul.f32 1.0, %v1474
    %v1476 = vtanh.pop %v1436
    %v1477 = vtanh.pop %v1437
    %v1480 = vrot.slane %v1389, 7
    %v1481 = vrot.slane %v1390, 7
    %v1484 = vmul.f32 %v1460, %v1480
    %v1485 = vmul.f32 %v1475, %v1481
    %1488 = vrot.lane.b32.xlu0 %v1476, 64
    %v1489 = vpop.permute.xlu0 %1488
    %1490 = vrot.lane.b32.xlu0 %v1477, 64
    %v1491 = vpop.permute.xlu0 %1490
    %v1494 = vmul.f32 %v1460, %v1489
    %v1495 = vmul.f32 %v1475, %v1491
    %1498 = vrot.lane.b32.xlu0 %v1494, 32
    %v1499 = vpop.permute.xlu0 %1498
    %1500 = vrot.lane.b32.xlu0 %v1495, 32
    %v1501 = vpop.permute.xlu0 %1500
    %v1504 = vadd.f32 %v1484, %v1499
    %v1505 = vadd.f32 %v1485, %v1501
    %v1506 = vtanh.pop %v1504
    %v1507 = vtanh.pop %v1505
    %1510 = vrot.lane.b32.xlu0 %v1506, 64
    %v1511 = vpop.permute.xlu0 %1510
    %1512 = vrot.lane.b32.xlu0 %v1507, 64
    %v1513 = vpop.permute.xlu0 %1512
    %v1516 = vmul.f32 %v1460, %v1511
    %v1517 = vmul.f32 %v1475, %v1513
    %v1520 = vrot.slane %v1516, 2
    %v1521 = vrot.slane %v1517, 1
    %v1522 = vsel %vm301, %v1521, %v1520
    %1523 = vrot.lane.b32.xlu0 %v1522, 32
    %v1524 = vpop.permute.xlu0 %1523
    %v1525 = vsel %vm186, %v1524, 0
    %1527 = vmatpush.msra.mxu0 0.0
    %1528 = vmatpush.msra.mxu0 0.0
    %1529 = vmatpush.msra.mxu0 0.0
    %1530 = vmatpush.msra.mxu0 0.0
    %1531 = vmatpush.msra.mxu0 0.0
    %1532 = vmatpush.msra.mxu0 0.0
    %1533 = vmatpush.msra.mxu0 0.0
    %1534 = vmatpush.msra.mxu0 0.0
    %1535 = vmatpush.msra.mxu0 0.0
    %1536 = vmatpush.msra.mxu0 0.0
    %1537 = vmatpush.msra.mxu0 0.0
    %1538 = vmatpush.msra.mxu0 0.0
    %1539 = vmatpush.msra.mxu0 %v1136
    %1540 = vmatpush.msra.mxu0 %v1135
    %1541 = vmatpush.msra.mxu0 %v1134
    %1542 = vmatpush.msra.mxu0 %v1133
    %1543 = vmatmul.f32.gmra.mxu0 %v1525
    %v1544 = vpop.f32.mrf.mxu0
    %v1545 = vadd.f32 0.0, %v1544
    %1546 = vdwg.mxu0
    %v1548 = vrot.slane %v1545, 5
    %v1549 = vrot.slane %v1545, 6
    %v1552 = vadd.f32 %v1169, %v1548
    %v1553 = vadd.f32 %v1172, %v1549
    %v1554 = vxor.u32 %v1552, 2147483648
    %v1555 = vxor.u32 %v1553, 2147483648
    %v1556 = vmul.f32 %v1554, 1.442695
    %v1557 = vpow.pop %v1556
    %v1558 = vmul.f32 %v1555, 1.442695
    %v1559 = vpow.pop %v1558
    %v1560 = vadd.f32 %v1557, 1.0
    %v1561 = vadd.f32 %v1559, 1.0
    %v1562 = vrcp.pop %v1560
    %v1563 = vmul.f32 %v1560, %v1562
    %v1564 = vsub.f32 1.0, %v1563
    %v1565 = vmul.f32 %v1562, %v1564
    %v1566 = vadd.f32 %v1562, %v1565
    %vm1567 = vweird.f32 %v1560
    %vm1568 = vweird.f32 %v1562
    %vm1569 = vmor %vm1567, %vm1568
    %v1570 = vsel %vm1569, %v1562, %v1566
    %v1571 = vand.u32 2147483647, %v1560
    %vm1572 = vcmp.eq.f32.partialorder %v1571, 8.507059e+37
    %v1573 = vand.u32 %v1560, 2147483648
    %v1574 = vor.u32 1.1754944e-38, %v1573
    %v1575 = vsel %vm1572, %v1574, %v1570
    %v1576 = vmul.f32 1.0, %v1575
    %v1577 = vrcp.pop %v1561
    %v1578 = vmul.f32 %v1561, %v1577
    %v1579 = vsub.f32 1.0, %v1578
    %v1580 = vmul.f32 %v1577, %v1579
    %v1581 = vadd.f32 %v1577, %v1580
    %vm1582 = vweird.f32 %v1561
    %vm1583 = vweird.f32 %v1577
    %vm1584 = vmor %vm1582, %vm1583
    %v1585 = vsel %vm1584, %v1577, %v1581
    %v1586 = vand.u32 2147483647, %v1561
    %vm1587 = vcmp.eq.f32.partialorder %v1586, 8.507059e+37
    %v1588 = vand.u32 %v1561, 2147483648
    %v1589 = vor.u32 1.1754944e-38, %v1588
    %v1590 = vsel %vm1587, %v1589, %v1585
    %v1591 = vmul.f32 1.0, %v1590
    %v1592 = vtanh.pop %v1552
    %v1593 = vtanh.pop %v1553
    %v1596 = vrot.slane %v1504, 7
    %v1597 = vrot.slane %v1505, 7
    %v1600 = vmul.f32 %v1576, %v1596
    %v1601 = vmul.f32 %v1591, %v1597
    %1604 = vrot.lane.b32.xlu0 %v1592, 64
    %v1605 = vpop.permute.xlu0 %1604
    %1606 = vrot.lane.b32.xlu0 %v1593, 64
    %v1607 = vpop.permute.xlu0 %1606
    %v1610 = vmul.f32 %v1576, %v1605
    %v1611 = vmul.f32 %v1591, %v1607
    %1614 = vrot.lane.b32.xlu0 %v1610, 32
    %v1615 = vpop.permute.xlu0 %1614
    %1616 = vrot.lane.b32.xlu0 %v1611, 32
    %v1617 = vpop.permute.xlu0 %1616
    %v1620 = vadd.f32 %v1600, %v1615
    %v1621 = vadd.f32 %v1601, %v1617
    %v1622 = vtanh.pop %v1620
    %v1623 = vtanh.pop %v1621
    %1626 = vrot.lane.b32.xlu0 %v1622, 64
    %v1627 = vpop.permute.xlu0 %1626
    %1628 = vrot.lane.b32.xlu0 %v1623, 64
    %v1629 = vpop.permute.xlu0 %1628
    %v1632 = vmul.f32 %v1576, %v1627
    %v1633 = vmul.f32 %v1591, %v1629
    %v1636 = vrot.slane %v1632, 3
    %v1637 = vrot.slane %v1633, 2
    %v1638 = vsel %vm301, %v1637, %v1636
    %1639 = vrot.lane.b32.xlu0 %v1638, 32
    %v1640 = vpop.permute.xlu0 %1639
    %v1641 = vsel %vm186, %v1640, 0
    %1643 = vmatpush.msra.mxu0 0.0
    %1644 = vmatpush.msra.mxu0 0.0
    %1645 = vmatpush.msra.mxu0 0.0
    %1646 = vmatpush.msra.mxu0 0.0
    %1647 = vmatpush.msra.mxu0 0.0
    %1648 = vmatpush.msra.mxu0 0.0
    %1649 = vmatpush.msra.mxu0 0.0
    %1650 = vmatpush.msra.mxu0 0.0
    %1651 = vmatpush.msra.mxu0 0.0
    %1652 = vmatpush.msra.mxu0 0.0
    %1653 = vmatpush.msra.mxu0 0.0
    %1654 = vmatpush.msra.mxu0 0.0
    %1655 = vmatpush.msra.mxu0 %v1136
    %1656 = vmatpush.msra.mxu0 %v1135
    %1657 = vmatpush.msra.mxu0 %v1134
    %1658 = vmatpush.msra.mxu0 %v1133
    %1659 = vmatmul.f32.gmra.mxu0 %v1641
    %v1660 = vpop.f32.mrf.mxu0
    %v1661 = vadd.f32 0.0, %v1660
    %1662 = vdwg.mxu0
    %v1664 = vrot.slane %v1661, 4
    %v1665 = vrot.slane %v1661, 5
    %v1668 = vadd.f32 %v1169, %v1664
    %v1669 = vadd.f32 %v1172, %v1665
    %v1670 = vxor.u32 %v1668, 2147483648
    %v1671 = vxor.u32 %v1669, 2147483648
    %v1672 = vmul.f32 %v1670, 1.442695
    %v1673 = vpow.pop %v1672
    %v1674 = vmul.f32 %v1671, 1.442695
    %v1675 = vpow.pop %v1674
    %v1676 = vadd.f32 %v1673, 1.0
    %v1677 = vadd.f32 %v1675, 1.0
    %v1678 = vrcp.pop %v1676
    %v1679 = vmul.f32 %v1676, %v1678
    %v1680 = vsub.f32 1.0, %v1679
    %v1681 = vmul.f32 %v1678, %v1680
    %v1682 = vadd.f32 %v1678, %v1681
    %vm1683 = vweird.f32 %v1676
    %vm1684 = vweird.f32 %v1678
    %vm1685 = vmor %vm1683, %vm1684
    %v1686 = vsel %vm1685, %v1678, %v1682
    %v1687 = vand.u32 2147483647, %v1676
    %vm1688 = vcmp.eq.f32.partialorder %v1687, 8.507059e+37
    %v1689 = vand.u32 %v1676, 2147483648
    %v1690 = vor.u32 1.1754944e-38, %v1689
    %v1691 = vsel %vm1688, %v1690, %v1686
    %v1692 = vmul.f32 1.0, %v1691
    %v1693 = vrcp.pop %v1677
    %v1694 = vmul.f32 %v1677, %v1693
    %v1695 = vsub.f32 1.0, %v1694
    %v1696 = vmul.f32 %v1693, %v1695
    %v1697 = vadd.f32 %v1693, %v1696
    %vm1698 = vweird.f32 %v1677
    %vm1699 = vweird.f32 %v1693
    %vm1700 = vmor %vm1698, %vm1699
    %v1701 = vsel %vm1700, %v1693, %v1697
    %v1702 = vand.u32 2147483647, %v1677
    %vm1703 = vcmp.eq.f32.partialorder %v1702, 8.507059e+37
    %v1704 = vand.u32 %v1677, 2147483648
    %v1705 = vor.u32 1.1754944e-38, %v1704
    %v1706 = vsel %vm1703, %v1705, %v1701
    %v1707 = vmul.f32 1.0, %v1706
    %v1708 = vtanh.pop %v1668
    %v1709 = vtanh.pop %v1669
    %v1712 = vrot.slane %v1620, 7
    %v1713 = vrot.slane %v1621, 7
    %v1716 = vmul.f32 %v1692, %v1712
    %v1717 = vmul.f32 %v1707, %v1713
    %1720 = vrot.lane.b32.xlu0 %v1708, 64
    %v1721 = vpop.permute.xlu0 %1720
    %1722 = vrot.lane.b32.xlu0 %v1709, 64
    %v1723 = vpop.permute.xlu0 %1722
    %v1726 = vmul.f32 %v1692, %v1721
    %v1727 = vmul.f32 %v1707, %v1723
    %1730 = vrot.lane.b32.xlu0 %v1726, 32
    %v1731 = vpop.permute.xlu0 %1730
    %1732 = vrot.lane.b32.xlu0 %v1727, 32
    %v1733 = vpop.permute.xlu0 %1732
    %v1736 = vadd.f32 %v1716, %v1731
    %v1737 = vadd.f32 %v1717, %v1733
    %v1738 = vtanh.pop %v1736
    %v1739 = vtanh.pop %v1737
    %1742 = vrot.lane.b32.xlu0 %v1738, 64
    %v1743 = vpop.permute.xlu0 %1742
    %1744 = vrot.lane.b32.xlu0 %v1739, 64
    %v1745 = vpop.permute.xlu0 %1744
    %v1748 = vmul.f32 %v1692, %v1743
    %v1749 = vmul.f32 %v1707, %v1745
    %v1752 = vrot.slane %v1748, 4
    %v1753 = vrot.slane %v1749, 3
    %v1754 = vsel %vm301, %v1753, %v1752
    %1755 = vrot.lane.b32.xlu0 %v1754, 32
    %v1756 = vpop.permute.xlu0 %1755
    %v1757 = vsel %vm186, %v1756, 0
    %1759 = vmatpush.msra.mxu0 0.0
    %1760 = vmatpush.msra.mxu0 0.0
    %1761 = vmatpush.msra.mxu0 0.0
    %1762 = vmatpush.msra.mxu0 0.0
    %1763 = vmatpush.msra.mxu0 0.0
    %1764 = vmatpush.msra.mxu0 0.0
    %1765 = vmatpush.msra.mxu0 0.0
    %1766 = vmatpush.msra.mxu0 0.0
    %1767 = vmatpush.msra.mxu0 0.0
    %1768 = vmatpush.msra.mxu0 0.0
    %1769 = vmatpush.msra.mxu0 0.0
    %1770 = vmatpush.msra.mxu0 0.0
    %1771 = vmatpush.msra.mxu0 %v1136
    %1772 = vmatpush.msra.mxu0 %v1135
    %1773 = vmatpush.msra.mxu0 %v1134
    %1774 = vmatpush.msra.mxu0 %v1133
    %1775 = vmatmul.f32.gmra.mxu0 %v1757
    %v1776 = vpop.f32.mrf.mxu0
    %v1777 = vadd.f32 0.0, %v1776
    %1778 = vdwg.mxu0
    %v1780 = vrot.slane %v1777, 3
    %v1781 = vrot.slane %v1777, 4
    %v1784 = vadd.f32 %v1169, %v1780
    %v1785 = vadd.f32 %v1172, %v1781
    %v1786 = vxor.u32 %v1784, 2147483648
    %v1787 = vxor.u32 %v1785, 2147483648
    %v1788 = vmul.f32 %v1786, 1.442695
    %v1789 = vpow.pop %v1788
    %v1790 = vmul.f32 %v1787, 1.442695
    %v1791 = vpow.pop %v1790
    %v1792 = vadd.f32 %v1789, 1.0
    %v1793 = vadd.f32 %v1791, 1.0
    %v1794 = vrcp.pop %v1792
    %v1795 = vmul.f32 %v1792, %v1794
    %v1796 = vsub.f32 1.0, %v1795
    %v1797 = vmul.f32 %v1794, %v1796
    %v1798 = vadd.f32 %v1794, %v1797
    %vm1799 = vweird.f32 %v1792
    %vm1800 = vweird.f32 %v1794
    %vm1801 = vmor %vm1799, %vm1800
    %v1802 = vsel %vm1801, %v1794, %v1798
    %v1803 = vand.u32 2147483647, %v1792
    %vm1804 = vcmp.eq.f32.partialorder %v1803, 8.507059e+37
    %v1805 = vand.u32 %v1792, 2147483648
    %v1806 = vor.u32 1.1754944e-38, %v1805
    %v1807 = vsel %vm1804, %v1806, %v1802
    %v1808 = vmul.f32 1.0, %v1807
    %v1809 = vrcp.pop %v1793
    %v1810 = vmul.f32 %v1793, %v1809
    %v1811 = vsub.f32 1.0, %v1810
    %v1812 = vmul.f32 %v1809, %v1811
    %v1813 = vadd.f32 %v1809, %v1812
    %vm1814 = vweird.f32 %v1793
    %vm1815 = vweird.f32 %v1809
    %vm1816 = vmor %vm1814, %vm1815
    %v1817 = vsel %vm1816, %v1809, %v1813
    %v1818 = vand.u32 2147483647, %v1793
    %vm1819 = vcmp.eq.f32.partialorder %v1818, 8.507059e+37
    %v1820 = vand.u32 %v1793, 2147483648
    %v1821 = vor.u32 1.1754944e-38, %v1820
    %v1822 = vsel %vm1819, %v1821, %v1817
    %v1823 = vmul.f32 1.0, %v1822
    %v1824 = vtanh.pop %v1784
    %v1825 = vtanh.pop %v1785
    %v1828 = vrot.slane %v1736, 7
    %v1829 = vrot.slane %v1737, 7
    %v1832 = vmul.f32 %v1808, %v1828
    %v1833 = vmul.f32 %v1823, %v1829
    %1836 = vrot.lane.b32.xlu0 %v1824, 64
    %v1837 = vpop.permute.xlu0 %1836
    %1838 = vrot.lane.b32.xlu0 %v1825, 64
    %v1839 = vpop.permute.xlu0 %1838
    %v1842 = vmul.f32 %v1808, %v1837
    %v1843 = vmul.f32 %v1823, %v1839
    %1846 = vrot.lane.b32.xlu0 %v1842, 32
    %v1847 = vpop.permute.xlu0 %1846
    %1848 = vrot.lane.b32.xlu0 %v1843, 32
    %v1849 = vpop.permute.xlu0 %1848
    %v1852 = vadd.f32 %v1832, %v1847
    %v1853 = vadd.f32 %v1833, %v1849
    %v1854 = vtanh.pop %v1852
    %v1855 = vtanh.pop %v1853
    %1858 = vrot.lane.b32.xlu0 %v1854, 64
    %v1859 = vpop.permute.xlu0 %1858
    %1860 = vrot.lane.b32.xlu0 %v1855, 64
    %v1861 = vpop.permute.xlu0 %1860
    %v1864 = vmul.f32 %v1808, %v1859
    %v1865 = vmul.f32 %v1823, %v1861
    %v1868 = vrot.slane %v1864, 5
    %v1869 = vrot.slane %v1865, 4
    %v1870 = vsel %vm301, %v1869, %v1868
    %1871 = vrot.lane.b32.xlu0 %v1870, 32
    %v1872 = vpop.permute.xlu0 %1871
    %v1873 = vsel %vm186, %v1872, 0
    %1875 = vmatpush.msra.mxu0 0.0
    %1876 = vmatpush.msra.mxu0 0.0
    %1877 = vmatpush.msra.mxu0 0.0
    %1878 = vmatpush.msra.mxu0 0.0
    %1879 = vmatpush.msra.mxu0 0.0
    %1880 = vmatpush.msra.mxu0 0.0
    %1881 = vmatpush.msra.mxu0 0.0
    %1882 = vmatpush.msra.mxu0 0.0
    %1883 = vmatpush.msra.mxu0 0.0
    %1884 = vmatpush.msra.mxu0 0.0
    %1885 = vmatpush.msra.mxu0 0.0
    %1886 = vmatpush.msra.mxu0 0.0
    %1887 = vmatpush.msra.mxu0 %v1136
    %1888 = vmatpush.msra.mxu0 %v1135
    %1889 = vmatpush.msra.mxu0 %v1134
    %1890 = vmatpush.msra.mxu0 %v1133
    %1891 = vmatmul.f32.gmra.mxu0 %v1873
    %v1892 = vpop.f32.mrf.mxu0
    %v1893 = vadd.f32 0.0, %v1892
    %1894 = vdwg.mxu0
    %v1896 = vrot.slane %v1893, 2
    %v1897 = vrot.slane %v1893, 3
    %v1900 = vadd.f32 %v1169, %v1896
    %v1901 = vadd.f32 %v1172, %v1897
    %v1902 = vxor.u32 %v1900, 2147483648
    %v1903 = vxor.u32 %v1901, 2147483648
    %v1904 = vmul.f32 %v1902, 1.442695
    %v1905 = vpow.pop %v1904
    %v1906 = vmul.f32 %v1903, 1.442695
    %v1907 = vpow.pop %v1906
    %v1908 = vadd.f32 %v1905, 1.0
    %v1909 = vadd.f32 %v1907, 1.0
    %v1910 = vrcp.pop %v1908
    %v1911 = vmul.f32 %v1908, %v1910
    %v1912 = vsub.f32 1.0, %v1911
    %v1913 = vmul.f32 %v1910, %v1912
    %v1914 = vadd.f32 %v1910, %v1913
    %vm1915 = vweird.f32 %v1908
    %vm1916 = vweird.f32 %v1910
    %vm1917 = vmor %vm1915, %vm1916
    %v1918 = vsel %vm1917, %v1910, %v1914
    %v1919 = vand.u32 2147483647, %v1908
    %vm1920 = vcmp.eq.f32.partialorder %v1919, 8.507059e+37
    %v1921 = vand.u32 %v1908, 2147483648
    %v1922 = vor.u32 1.1754944e-38, %v1921
    %v1923 = vsel %vm1920, %v1922, %v1918
    %v1924 = vmul.f32 1.0, %v1923
    %v1925 = vrcp.pop %v1909
    %v1926 = vmul.f32 %v1909, %v1925
    %v1927 = vsub.f32 1.0, %v1926
    %v1928 = vmul.f32 %v1925, %v1927
    %v1929 = vadd.f32 %v1925, %v1928
    %vm1930 = vweird.f32 %v1909
    %vm1931 = vweird.f32 %v1925
    %vm1932 = vmor %vm1930, %vm1931
    %v1933 = vsel %vm1932, %v1925, %v1929
    %v1934 = vand.u32 2147483647, %v1909
    %vm1935 = vcmp.eq.f32.partialorder %v1934, 8.507059e+37
    %v1936 = vand.u32 %v1909, 2147483648
    %v1937 = vor.u32 1.1754944e-38, %v1936
    %v1938 = vsel %vm1935, %v1937, %v1933
    %v1939 = vmul.f32 1.0, %v1938
    %v1940 = vtanh.pop %v1900
    %v1941 = vtanh.pop %v1901
    %v1944 = vrot.slane %v1852, 7
    %v1945 = vrot.slane %v1853, 7
    %v1948 = vmul.f32 %v1924, %v1944
    %v1949 = vmul.f32 %v1939, %v1945
    %1952 = vrot.lane.b32.xlu0 %v1940, 64
    %v1953 = vpop.permute.xlu0 %1952
    %1954 = vrot.lane.b32.xlu0 %v1941, 64
    %v1955 = vpop.permute.xlu0 %1954
    %v1958 = vmul.f32 %v1924, %v1953
    %v1959 = vmul.f32 %v1939, %v1955
    %1962 = vrot.lane.b32.xlu0 %v1958, 32
    %v1963 = vpop.permute.xlu0 %1962
    %1964 = vrot.lane.b32.xlu0 %v1959, 32
    %v1965 = vpop.permute.xlu0 %1964
    %v1968 = vadd.f32 %v1948, %v1963
    %v1969 = vadd.f32 %v1949, %v1965
    %v1970 = vtanh.pop %v1968
    %v1971 = vtanh.pop %v1969
    %1974 = vrot.lane.b32.xlu0 %v1970, 64
    %v1975 = vpop.permute.xlu0 %1974
    %1976 = vrot.lane.b32.xlu0 %v1971, 64
    %v1977 = vpop.permute.xlu0 %1976
    %v1980 = vmul.f32 %v1924, %v1975
    %v1981 = vmul.f32 %v1939, %v1977
    %v1984 = vrot.slane %v1980, 6
    %v1985 = vrot.slane %v1981, 5
    %v1986 = vsel %vm301, %v1985, %v1984
    %1987 = vrot.lane.b32.xlu0 %v1986, 32
    %v1988 = vpop.permute.xlu0 %1987
    %v1989 = vsel %vm186, %v1988, 0
    %1991 = vmatpush.msra.mxu0 0.0
    %1992 = vmatpush.msra.mxu0 0.0
    %1993 = vmatpush.msra.mxu0 0.0
    %1994 = vmatpush.msra.mxu0 0.0
    %1995 = vmatpush.msra.mxu0 0.0
    %1996 = vmatpush.msra.mxu0 0.0
    %1997 = vmatpush.msra.mxu0 0.0
    %1998 = vmatpush.msra.mxu0 0.0
    %1999 = vmatpush.msra.mxu0 0.0
    %2000 = vmatpush.msra.mxu0 0.0
    %2001 = vmatpush.msra.mxu0 0.0
    %2002 = vmatpush.msra.mxu0 0.0
    %2003 = vmatpush.msra.mxu0 %v1136
    %2004 = vmatpush.msra.mxu0 %v1135
    %2005 = vmatpush.msra.mxu0 %v1134
    %2006 = vmatpush.msra.mxu0 %v1133
    %2007 = vmatmul.f32.gmra.mxu0 %v1989
    %v2008 = vpop.f32.mrf.mxu0
    %v2009 = vadd.f32 0.0, %v2008
    %2010 = vdwg.mxu0
    %v2012 = vrot.slane %v2009, 1
    %v2013 = vrot.slane %v2009, 2
    %v2016 = vadd.f32 %v1169, %v2012
    %v2017 = vadd.f32 %v1172, %v2013
    %v2018 = vxor.u32 %v2016, 2147483648
    %v2019 = vxor.u32 %v2017, 2147483648
    %v2020 = vmul.f32 %v2018, 1.442695
    %v2021 = vpow.pop %v2020
    %v2022 = vmul.f32 %v2019, 1.442695
    %v2023 = vpow.pop %v2022
    %v2024 = vadd.f32 %v2021, 1.0
    %v2025 = vadd.f32 %v2023, 1.0
    %v2026 = vrcp.pop %v2024
    %v2027 = vmul.f32 %v2024, %v2026
    %v2028 = vsub.f32 1.0, %v2027
    %v2029 = vmul.f32 %v2026, %v2028
    %v2030 = vadd.f32 %v2026, %v2029
    %vm2031 = vweird.f32 %v2024
    %vm2032 = vweird.f32 %v2026
    %vm2033 = vmor %vm2031, %vm2032
    %v2034 = vsel %vm2033, %v2026, %v2030
    %v2035 = vand.u32 2147483647, %v2024
    %vm2036 = vcmp.eq.f32.partialorder %v2035, 8.507059e+37
    %v2037 = vand.u32 %v2024, 2147483648
    %v2038 = vor.u32 1.1754944e-38, %v2037
    %v2039 = vsel %vm2036, %v2038, %v2034
    %v2040 = vmul.f32 1.0, %v2039
    %v2041 = vrcp.pop %v2025
    %v2042 = vmul.f32 %v2025, %v2041
    %v2043 = vsub.f32 1.0, %v2042
    %v2044 = vmul.f32 %v2041, %v2043
    %v2045 = vadd.f32 %v2041, %v2044
    %vm2046 = vweird.f32 %v2025
    %vm2047 = vweird.f32 %v2041
    %vm2048 = vmor %vm2046, %vm2047
    %v2049 = vsel %vm2048, %v2041, %v2045
    %v2050 = vand.u32 2147483647, %v2025
    %vm2051 = vcmp.eq.f32.partialorder %v2050, 8.507059e+37
    %v2052 = vand.u32 %v2025, 2147483648
    %v2053 = vor.u32 1.1754944e-38, %v2052
    %v2054 = vsel %vm2051, %v2053, %v2049
    %v2055 = vmul.f32 1.0, %v2054
    %v2056 = vtanh.pop %v2016
    %v2057 = vtanh.pop %v2017
    %v2060 = vrot.slane %v1968, 7
    %v2061 = vrot.slane %v1969, 7
    %v2064 = vmul.f32 %v2040, %v2060
    %v2065 = vmul.f32 %v2055, %v2061
    %2068 = vrot.lane.b32.xlu0 %v2056, 64
    %v2069 = vpop.permute.xlu0 %2068
    %2070 = vrot.lane.b32.xlu0 %v2057, 64
    %v2071 = vpop.permute.xlu0 %2070
    %v2074 = vmul.f32 %v2040, %v2069
    %v2075 = vmul.f32 %v2055, %v2071
    %2078 = vrot.lane.b32.xlu0 %v2074, 32
    %v2079 = vpop.permute.xlu0 %2078
    %2080 = vrot.lane.b32.xlu0 %v2075, 32
    %v2081 = vpop.permute.xlu0 %2080
    %v2084 = vadd.f32 %v2064, %v2079
    %v2085 = vadd.f32 %v2065, %v2081
    %v2086 = vtanh.pop %v2084
    %v2087 = vtanh.pop %v2085
    %2090 = vrot.lane.b32.xlu0 %v2086, 64
    %v2091 = vpop.permute.xlu0 %2090
    %2092 = vrot.lane.b32.xlu0 %v2087, 64
    %v2093 = vpop.permute.xlu0 %2092
    %v2096 = vmul.f32 %v2040, %v2091
    %v2097 = vmul.f32 %v2055, %v2093
    %v2098 = vsel %vm1108, %v1287, %v1401
    %v2099 = vsel %vm1108, %v1288, %v1402
    %v2100 = vsel %vm1111, %v2098, %v1516
    %v2101 = vsel %vm1111, %v2099, %v1517
    %v2102 = vsel %vm1114, %v2100, %v1632
    %v2103 = vsel %vm1114, %v2101, %v1633
    %v2104 = vsel %vm1117, %v2102, %v1748
    %v2105 = vsel %vm1117, %v2103, %v1749
    %v2106 = vsel %vm1120, %v2104, %v1864
    %v2107 = vsel %vm1120, %v2105, %v1865
    %v2108 = vsel %vm1123, %v2106, %v1980
    %v2109 = vsel %vm1123, %v2107, %v1981
    %v2110 = vsel %vm1126, %v2108, %v2096
    %v2111 = vsel %vm1126, %v2109, %v2097
    %2114 = vrot.lane.b32.xlu0 %v2110, 32
    %v2115 = vpop.permute.xlu0 %2114
    %2116 = vrot.lane.b32.xlu0 %v2111, 32
    %v2117 = vpop.permute.xlu0 %2116
    %2120 = vst.msk [vmem:[#allocation14] sm:$0xff] %vm186, %v2115
    %2121 = vst.msk [vmem:[#allocation14 + $0x8] sm:$0xff] %vm186, %v2117
    // Predicated region
    $region66: #{tpu_custom_call.1} parent=1 // pred_check
      _
    $region67: #{tpu_custom_call.1} parent=1 // pred_check_branch
      %2123 = sbr.rel (0) target = $region69
    $region68: #{tpu_custom_call.1} parent=1 // pred_region
      %2125 = vsyncadd [#allocation4], 0
      %s2126 = sshll.u32 [#allocation14], 4
      %s2127 = int_to_ptr.vmem [resolvable:$true] %s2126
      %s2128 = sshll.u32 %s9, 4
      %s2129 = int_to_ptr.hbm [resolvable:$true] %s2128
      %2134 = dma.vmem_to_hbm [thread:$0]  %s2127, 256, %s2129, [#allocation4], 128, 128, 8
    $region69: #{tpu_custom_call.1} parent=1 // pred_fallthru
      _
    // Predicated region
    $region70: #{tpu_custom_call.1} parent=1 // pred_check
      _
    $region71: #{tpu_custom_call.1} parent=1 // pred_check_branch
      %2136 = sbr.rel (0) target = $region73
    $region72: #{tpu_custom_call.1} parent=1 // pred_region
      %2138 = dma.done [#allocation4], 256
    $region73: #{tpu_custom_call.1} parent=1 // pred_fallthru
      _
    %2139 = vsyncpa [#allocation3], 1
    %2140 = vsyncpa [#allocation6], 1
    %2141 = vsyncpa [#allocation9], 1
    %2142 = vsyncpa [#allocation12], 1
    %2143 = vsyncpa [#allocation4], 1

</llo_original>
